<compile_context>
chip_gen: v7x
topology: tpu7x:2x2x1
jax: 0.10.0
libtpu: 0.0.40
codegen_flags: <defaults>
</compile_context>

<pallas_src>
import functools

import jax
import jax.numpy as jnp
from jax.experimental import pallas as pl
from jax.experimental.pallas import tpu as pltpu


def _round_up(x, m):
    return (x + m - 1) // m * m


def _vmem_capacity_bytes():
    try:
        return int(pltpu.get_tpu_info().vmem_capacity_bytes)
    except Exception:
        return 64 * 1024 * 1024  # conservative (v7x-sized) fallback


def _num_tensorcores():
    """Best-effort TensorCores-per-device (2 on v4/v7x megacore, else 1)."""
    try:
        dev = jax.devices()[0]
        nc = getattr(dev, "num_cores", None)
        if nc:
            return min(max(int(nc), 1), 2)
        kind = str(getattr(dev, "device_kind", "")).lower()
        if "v4" in kind or "v7" in kind:
            return 2
    except Exception:
        pass
    return 1


def _lstm_recurrence_kernel(x_ref, w_ih_ref, w_hh_ref, ht_ref, ct_ref,
                            xproj_scr, h_scr, c_scr, *,
                            last_steps, unroll):
    """One grid step = one time block for one batch tile.

    x_ref:     (t_blk, b_tile, i_pad)  f32   raw inputs (+ ones column for bias)
    w_ih_ref:  (i_pad, 4*h_pad)        bf16  input weights (bias folded in)
    w_hh_ref:  (h_pad, 4*h_pad)        bf16  recurrent weights
    """
    t_blk, b_tile, i_pad = x_ref.shape
    H = w_hh_ref.shape[0]                        # padded hidden (multiple of 128)
    tb = pl.program_id(1)                        # time-block index (serial axis)
    n_tb = pl.num_programs(1)

    @pl.when(tb == 0)
    def _():
        h_scr[...] = jnp.zeros_like(h_scr)
        c_scr[...] = jnp.zeros_like(c_scr)

    # ---- fused input projection for the whole block: one parallel MXU matmul ----
    x_blk = x_ref[...].astype(jnp.bfloat16).reshape(t_blk * b_tile, i_pad)
    xproj = jnp.dot(x_blk, w_ih_ref[...], preferred_element_type=jnp.float32)
    xproj_scr[...] = xproj.reshape(t_blk, b_tile, 4 * H)

    w_hh = w_hh_ref[...]                         # (H, 4H) bf16, resident for the block

    def _sigmoid(z):
        # One EUP pass (tanh) instead of exp + reciprocal.
        return 0.5 * jnp.tanh(0.5 * z) + 0.5

    def step(tl, carry):
        h, c = carry                             # f32 (b_tile, H)
        gates = (jnp.dot(h.astype(w_hh.dtype), w_hh,
                         preferred_element_type=jnp.float32)
                 + xproj_scr[tl])                # (b_tile, 4H) f32, gate order i,f,g,o
        i_g = _sigmoid(gates[:, 0 * H:1 * H])    # H multiple of 128 -> aligned views
        f_g = _sigmoid(gates[:, 1 * H:2 * H])
        g_g = jnp.tanh(gates[:, 2 * H:3 * H])
        o_g = _sigmoid(gates[:, 3 * H:4 * H])
        c_new = f_g * c + i_g * g_g
        h_new = o_g * jnp.tanh(c_new)
        return h_new, c_new

    def run(n_steps):
        u = max(1, min(unroll, n_steps))
        h, c = jax.lax.fori_loop(0, n_steps, step,
                                 (h_scr[...], c_scr[...]), unroll=u)
        h_scr[...] = h
        c_scr[...] = c

    if last_steps == t_blk:
        # Sequence is a multiple of t_blk: every block runs the full count.
        run(t_blk)
    else:
        # Only the final time block has padded steps -> run just the valid ones
        # (trip counts are static; no per-step masking anywhere).
        @pl.when(tb < n_tb - 1)
        def _():
            run(t_blk)

        @pl.when(tb == n_tb - 1)
        def _():
            run(last_steps)

    @pl.when(tb == n_tb - 1)
    def _():
        ht_ref[...] = h_scr[...]
        ct_ref[...] = c_scr[...]


def mylstm_forward(x, params, *, time_block=32, batch_tile=128, unroll=8):
    """x: (seq, batch, input_size) float32.  Returns (out, (ht, ct)) like Mylstm."""
    seq, batch, input_size = x.shape
    hidden = params["w_hh"].shape[1]

    # ---- pad to TPU-friendly shapes: hidden -> x128 (lane), batch -> x8 (sublane) ----
    h_pad = _round_up(hidden, 128)
    b_pad = _round_up(batch, 8)
    if b_pad > batch_tile:
        b_tile = batch_tile
        b_pad = _round_up(b_pad, b_tile)
    else:
        b_tile = b_pad

    # v7x/v4: guarantee >=2 blocks on the "parallel" batch axis so the second
    # TensorCore gets work.  No-op on 1-TC chips (v5e/v6e).
    num_cores = _num_tensorcores()
    if num_cores >= 2 and b_pad // b_tile < num_cores and b_pad >= 8 * num_cores:
        b_tile = _round_up(-(-b_pad // num_cores), 8)
        b_pad = _round_up(b_pad, b_tile)

    # Fold the bias into W_ih via an extra ones column on x.
    i_aug = input_size + 1
    i_pad = _round_up(i_aug, 8)

    # ---- VMEM-budget-aware time block (per TPU generation) ----
    vmem_cap = _vmem_capacity_bytes()
    budget = int(vmem_cap * 0.6)
    fixed = 2 * (i_pad * 4 * h_pad * 2 + h_pad * 4 * h_pad * 2)   # weights (bf16, 2-buf)
    fixed += 2 * b_tile * h_pad * 4                               # h/c scratch
    fixed += 2 * 2 * b_tile * h_pad * 4                           # ht/ct outputs (2-buf)
    per_t = b_tile * 4 * h_pad * 4                                # xproj scratch (1-buf)
    per_t += 2 * b_tile * i_pad * 4                               # x input f32 (2-buf)
    t_max = max(1, (budget - fixed) // per_t)
    t_blk = max(1, min(time_block, seq, t_max))
    seq_pad = _round_up(seq, t_blk)
    n_tblocks = seq_pad // t_blk
    last_steps = seq - (n_tblocks - 1) * t_blk                    # static, >= 1

    # ---- weights: pad per gate, transpose, bf16 for the MXU ----
    def _pad_gate_rows(w):                       # (4H, X) -> (4*h_pad, X), per gate
        w4 = w.reshape(4, hidden, w.shape[1])
        w4 = jnp.pad(w4, ((0, 0), (0, h_pad - hidden), (0, 0)))
        return w4.reshape(4 * h_pad, w.shape[1])

    bias = (params["b_ih"] + params["b_hh"]).reshape(4, hidden)
    bias_p = jnp.pad(bias, ((0, 0), (0, h_pad - hidden))).reshape(4 * h_pad)

    w_ih_p = _pad_gate_rows(params["w_ih"])                      # (4h_pad, I)
    w_ih_aug = jnp.concatenate([w_ih_p.T, bias_p[None, :]], 0)   # (I+1, 4h_pad)
    w_ih_t = jnp.pad(w_ih_aug, ((0, i_pad - i_aug), (0, 0))).astype(jnp.bfloat16)

    w_hh_p = _pad_gate_rows(params["w_hh"])                      # (4h_pad, H)
    w_hh_p = jnp.pad(w_hh_p, ((0, 0), (0, h_pad - hidden)))      # (4h_pad, h_pad)
    w_hh_t = w_hh_p.T.astype(jnp.bfloat16)                       # (h_pad, 4h_pad)

    # ---- inputs: append ones column (bias), pad seq/batch/feature ----
    x_aug = jnp.concatenate([x, jnp.ones((seq, batch, 1), x.dtype)], axis=-1)
    x_p = jnp.pad(x_aug, ((0, seq_pad - seq), (0, b_pad - batch),
                          (0, i_pad - i_aug))).astype(jnp.float32)

    kernel = functools.partial(_lstm_recurrence_kernel,
                               last_steps=last_steps, unroll=unroll)

    grid = (b_pad // b_tile, n_tblocks)

    ht_p, ct_p = pl.pallas_call(
        kernel,
        out_shape=(
            jax.ShapeDtypeStruct((b_pad, h_pad), jnp.float32),    # h_T
            jax.ShapeDtypeStruct((b_pad, h_pad), jnp.float32),    # c_T
        ),
        grid_spec=pltpu.PrefetchScalarGridSpec(
            num_scalar_prefetch=0,
            grid=grid,
            in_specs=[
                # raw input block (time-major), bias ones-column included.
                pl.BlockSpec((t_blk, b_tile, i_pad), lambda b, t: (t, b, 0)),
                # constant-index weights, resident in VMEM.
                pl.BlockSpec((i_pad, 4 * h_pad), lambda b, t: (0, 0)),
                pl.BlockSpec((h_pad, 4 * h_pad), lambda b, t: (0, 0)),
            ],
            out_specs=[
                pl.BlockSpec((b_tile, h_pad), lambda b, t: (b, 0)),
                pl.BlockSpec((b_tile, h_pad), lambda b, t: (b, 0)),
            ],
            scratch_shapes=[
                pltpu.VMEM((t_blk, b_tile, 4 * h_pad), jnp.float32),  # fused xproj
                pltpu.VMEM((b_tile, h_pad), jnp.float32),             # h carry
                pltpu.VMEM((b_tile, h_pad), jnp.float32),             # c carry
            ],
        ),
        compiler_params=pltpu.CompilerParams(
            dimension_semantics=("parallel", "arbitrary"),
            vmem_limit_bytes=int(vmem_cap * 3 // 4),
        ),
    )(x_p, w_ih_t, w_hh_t)

    ht_last = ht_p[:batch, :hidden]
    ct_last = ct_p[:batch, :hidden]

    # fc(ht[-1]): one-shot (B,H)@(H,1), lane-sparse -> plain JAX.
    # TODO(synk): dropout_fc (p=0 default) is identity; stochastic dropout would need
    # pltpu.prng_* inside a kernel.
    out = ht_last @ params["fc_w"].T + params["fc_b"]
    return out, (ht_last[None], ct_last[None])


def init_params(key, input_size, hidden_size, output_size):
    """Deterministic PyTorch-style uniform(-1/sqrt(H), 1/sqrt(H)) init."""
    k = 1.0 / jnp.sqrt(jnp.float32(hidden_size))
    keys = jax.random.split(key, 6)
    u = lambda kk, shape: jax.random.uniform(kk, shape, jnp.float32, -k, k)
    return {
        "w_ih": u(keys[0], (4 * hidden_size, input_size)),
        "w_hh": u(keys[1], (4 * hidden_size, hidden_size)),
        "b_ih": u(keys[2], (4 * hidden_size,)),
        "b_hh": u(keys[3], (4 * hidden_size,)),
        "fc_w": u(keys[4], (output_size, hidden_size)),
        "fc_b": u(keys[5], (output_size,)),
    }


def _reference_forward(x, params):
    """Pure-JAX f32 reference of the same LSTM + fc, for a sanity check."""
    seq, batch, _ = x.shape
    H = params["w_hh"].shape[1]
    h = jnp.zeros((batch, H), jnp.float32)
    c = jnp.zeros((batch, H), jnp.float32)

    def step(carry, x_t):
        h, c = carry
        gates = (x_t @ params["w_ih"].T + params["b_ih"]
                 + h @ params["w_hh"].T + params["b_hh"])
        i, f, g, o = jnp.split(gates, 4, axis=-1)
        c = jax.nn.sigmoid(f) * c + jax.nn.sigmoid(i) * jnp.tanh(g)
        h = jax.nn.sigmoid(o) * jnp.tanh(c)
        return (h, c), None

    (h, c), _ = jax.lax.scan(step, (h, c), x)
    out = h @ params["fc_w"].T + params["fc_b"]
    return out, (h[None], c[None])


if __name__ == "__main__":
    seq, batch, input_size, hidden_size, output_size = 8, 2, 4, 32, 1

    key = jax.random.PRNGKey(0)
    key_x, key_p = jax.random.split(key)
    x = jax.random.normal(key_x, (seq, batch, input_size), jnp.float32)
    params = init_params(key_p, input_size, hidden_size, output_size)

    out, (ht, ct) = jax.jit(mylstm_forward)(x, params)
    jax.block_until_ready((out, ht, ct))

    ref_out, (ref_ht, ref_ct) = _reference_forward(x, params)
    assert out.shape == (batch, output_size)
    assert ht.shape == (1, batch, hidden_size)
    assert ct.shape == (1, batch, hidden_size)
    # bf16 matmul inputs (f32 accumulation, f32 state) vs f32 reference -> relaxed tol.
    assert jnp.allclose(out, ref_out, atol=3e-2, rtol=3e-2), (
        f"out max diff {jnp.max(jnp.abs(out - ref_out))}")
    assert jnp.allclose(ht, ref_ht, atol=3e-2, rtol=3e-2), (
        f"ht max diff {jnp.max(jnp.abs(ht - ref_ht))}")
    assert jnp.allclose(ct, ref_ct, atol=3e-2, rtol=3e-2), (
        f"ct max diff {jnp.max(jnp.abs(ct - ref_ct))}")

    print("KERNEL_OK")
</pallas_src>

<mosaic_0001>
module attributes {stable_mosaic.version = 11 : i64} {
  func.func @_lstm_recurrence_kernel(%arg0: i32, %arg1: i32, %arg2: memref<8x8x8xf32, #tpu.memory_space<vmem>>, %arg3: memref<8x512xbf16, #tpu.memory_space<vmem>>, %arg4: memref<128x512xbf16, #tpu.memory_space<vmem>>, %arg5: memref<8x128xf32, #tpu.memory_space<vmem>>, %arg6: memref<8x128xf32, #tpu.memory_space<vmem>>, %arg7: memref<8x8x512xf32, #tpu.memory_space<vmem>>, %arg8: memref<8x128xf32, #tpu.memory_space<vmem>>, %arg9: memref<8x128xf32, #tpu.memory_space<vmem>>) attributes {dimension_semantics = [#tpu.dimension_semantics<parallel>, #tpu.dimension_semantics<arbitrary>], iteration_bounds = array<i64: 1, 1>, scalar_prefetch = 0 : i64, scratch_operands = 3 : i64, tpu.core_type = #tpu.core_type<tc>, window_params = [{transform_indices = @transform_0, window_bounds = array<i64: 8, 8, 8>}, {pipeline_mode = #tpu.pipeline_mode<synchronous>, transform_indices = @transform_1, window_bounds = array<i64: 8, 512>}, {pipeline_mode = #tpu.pipeline_mode<synchronous>, transform_indices = @transform_2, window_bounds = array<i64: 128, 512>}, {transform_indices = @transform_3, window_bounds = array<i64: 8, 128>}, {transform_indices = @transform_4, window_bounds = array<i64: 8, 128>}]} {
    %c0_i32 = arith.constant 0 : i32
    %0 = arith.cmpi eq, %arg1, %c0_i32 : i32
    %1 = arith.extui %0 : i1 to i32
    %c0_i32_0 = arith.constant 0 : i32
    %2 = arith.cmpi ne, %1, %c0_i32_0 : i32
    scf.if %2 {
      %cst_117 = arith.constant 0.000000e+00 : f32
      %314 = vector.broadcast %cst_117 : f32 to vector<8x128xf32>
      %c0_118 = arith.constant 0 : index
      %c0_119 = arith.constant 0 : index
      %315 = vector.load %arg8[%c0_118, %c0_119] : memref<8x128xf32, #tpu.memory_space<vmem>>, vector<8x128xf32>
      tpu.vector_store %arg8[%c0_118, %c0_119], %314 {strides = array<i32>} : memref<8x128xf32, #tpu.memory_space<vmem>>, vector<8x128xf32>,
      %cst_120 = arith.constant 0.000000e+00 : f32
      %316 = vector.broadcast %cst_120 : f32 to vector<8x128xf32>
      %c0_121 = arith.constant 0 : index
      %c0_122 = arith.constant 0 : index
      %317 = vector.load %arg9[%c0_121, %c0_122] : memref<8x128xf32, #tpu.memory_space<vmem>>, vector<8x128xf32>
      tpu.vector_store %arg9[%c0_121, %c0_122], %316 {strides = array<i32>} : memref<8x128xf32, #tpu.memory_space<vmem>>, vector<8x128xf32>,
    } else {
    }
    %c0 = arith.constant 0 : index
    %c0_1 = arith.constant 0 : index
    %c0_2 = arith.constant 0 : index
    %3 = vector.load %arg2[%c0, %c0_1, %c0_2] : memref<8x8x8xf32, #tpu.memory_space<vmem>>, vector<8x8x8xf32>
    %4 = arith.truncf %3 : vector<8x8x8xf32> to vector<8x8x8xbf16>
    %5 = vector.shape_cast %4 : vector<8x8x8xbf16> to vector<64x8xbf16>
    %c0_3 = arith.constant 0 : index
    %c0_4 = arith.constant 0 : index
    %6 = vector.load %arg3[%c0_3, %c0_4] : memref<8x512xbf16, #tpu.memory_space<vmem>>, vector<8x512xbf16>
    %cst = arith.constant dense<0.000000e+00> : vector<64x512xf32>
    %7 = tpu.matmul %5, %6, %cst {dimension_numbers = #tpu.dot_dimension_numbers<[1], [0], [0], [1], [0, 0, 1, 1], [], []>} : vector<64x8xbf16>, vector<8x512xbf16>, vector<64x512xf32> -> vector<64x512xf32>
    %8 = vector.shape_cast %7 : vector<64x512xf32> to vector<8x8x512xf32>
    %c0_5 = arith.constant 0 : index
    %c0_6 = arith.constant 0 : index
    %c0_7 = arith.constant 0 : index
    %9 = vector.load %arg7[%c0_5, %c0_6, %c0_7] : memref<8x8x512xf32, #tpu.memory_space<vmem>>, vector<8x8x512xf32>
    tpu.vector_store %arg7[%c0_5, %c0_6, %c0_7], %8 {strides = array<i32>} : memref<8x8x512xf32, #tpu.memory_space<vmem>>, vector<8x8x512xf32>,
    %c0_8 = arith.constant 0 : index
    %c0_9 = arith.constant 0 : index
    %10 = vector.load %arg4[%c0_8, %c0_9] : memref<128x512xbf16, #tpu.memory_space<vmem>>, vector<128x512xbf16>
    %c0_10 = arith.constant 0 : index
    %c0_11 = arith.constant 0 : index
    %11 = vector.load %arg8[%c0_10, %c0_11] : memref<8x128xf32, #tpu.memory_space<vmem>>, vector<8x128xf32>
    %c0_12 = arith.constant 0 : index
    %c0_13 = arith.constant 0 : index
    %12 = vector.load %arg9[%c0_12, %c0_13] : memref<8x128xf32, #tpu.memory_space<vmem>>, vector<8x128xf32>
    %c0_i32_14 = arith.constant 0 : i32
    %13 = arith.truncf %11 : vector<8x128xf32> to vector<8x128xbf16>
    %cst_15 = arith.constant dense<0.000000e+00> : vector<8x512xf32>
    %14 = tpu.matmul %13, %10, %cst_15 {dimension_numbers = #tpu.dot_dimension_numbers<[1], [0], [0], [1], [0, 0, 1, 1], [], []>} : vector<8x128xbf16>, vector<128x512xbf16>, vector<8x512xf32> -> vector<8x512xf32>
    %15 = arith.index_cast %c0_i32_14 : i32 to index
    %c0_16 = arith.constant 0 : index
    %c0_17 = arith.constant 0 : index
    %16 = vector.load %arg7[%15, %c0_16, %c0_17] : memref<8x8x512xf32, #tpu.memory_space<vmem>>, vector<1x8x512xf32>
    %17 = vector.shape_cast %16 : vector<1x8x512xf32> to vector<8x512xf32>
    %18 = arith.addf %14, %17 : vector<8x512xf32>
    %19 = vector.extract_strided_slice %18 {offsets = [0, 0], sizes = [8, 128], strides = [1, 1]} : vector<8x512xf32> to vector<8x128xf32>
    %cst_18 = arith.constant 5.000000e-01 : f32
    %20 = vector.broadcast %cst_18 : f32 to vector<8x128xf32>
    %21 = arith.mulf %20, %19 : vector<8x128xf32>
    %22 = math.tanh %21 : vector<8x128xf32>
    %cst_19 = arith.constant 5.000000e-01 : f32
    %23 = vector.broadcast %cst_19 : f32 to vector<8x128xf32>
    %24 = arith.mulf %23, %22 : vector<8x128xf32>
    %cst_20 = arith.constant 5.000000e-01 : f32
    %25 = vector.broadcast %cst_20 : f32 to vector<8x128xf32>
    %26 = arith.addf %24, %25 : vector<8x128xf32>
    %27 = vector.extract_strided_slice %18 {offsets = [0, 128], sizes = [8, 128], strides = [1, 1]} : vector<8x512xf32> to vector<8x128xf32>
    %cst_21 = arith.constant 5.000000e-01 : f32
    %28 = vector.broadcast %cst_21 : f32 to vector<8x128xf32>
    %29 = arith.mulf %28, %27 : vector<8x128xf32>
    %30 = math.tanh %29 : vector<8x128xf32>
    %cst_22 = arith.constant 5.000000e-01 : f32
    %31 = vector.broadcast %cst_22 : f32 to vector<8x128xf32>
    %32 = arith.mulf %31, %30 : vector<8x128xf32>
    %cst_23 = arith.constant 5.000000e-01 : f32
    %33 = vector.broadcast %cst_23 : f32 to vector<8x128xf32>
    %34 = arith.addf %32, %33 : vector<8x128xf32>
    %35 = vector.extract_strided_slice %18 {offsets = [0, 256], sizes = [8, 128], strides = [1, 1]} : vector<8x512xf32> to vector<8x128xf32>
    %36 = math.tanh %35 : vector<8x128xf32>
    %37 = vector.extract_strided_slice %18 {offsets = [0, 384], sizes = [8, 128], strides = [1, 1]} : vector<8x512xf32> to vector<8x128xf32>
    %cst_24 = arith.constant 5.000000e-01 : f32
    %38 = vector.broadcast %cst_24 : f32 to vector<8x128xf32>
    %39 = arith.mulf %38, %37 : vector<8x128xf32>
    %40 = math.tanh %39 : vector<8x128xf32>
    %cst_25 = arith.constant 5.000000e-01 : f32
    %41 = vector.broadcast %cst_25 : f32 to vector<8x128xf32>
    %42 = arith.mulf %41, %40 : vector<8x128xf32>
    %cst_26 = arith.constant 5.000000e-01 : f32
    %43 = vector.broadcast %cst_26 : f32 to vector<8x128xf32>
    %44 = arith.addf %42, %43 : vector<8x128xf32>
    %45 = arith.mulf %34, %12 : vector<8x128xf32>
    %46 = arith.mulf %26, %36 : vector<8x128xf32>
    %47 = arith.addf %45, %46 : vector<8x128xf32>
    %48 = math.tanh %47 : vector<8x128xf32>
    %49 = arith.mulf %44, %48 : vector<8x128xf32>
    %c1_i32 = arith.constant 1 : i32
    %50 = arith.truncf %49 : vector<8x128xf32> to vector<8x128xbf16>
    %cst_27 = arith.constant dense<0.000000e+00> : vector<8x512xf32>
    %51 = tpu.matmul %50, %10, %cst_27 {dimension_numbers = #tpu.dot_dimension_numbers<[1], [0], [0], [1], [0, 0, 1, 1], [], []>} : vector<8x128xbf16>, vector<128x512xbf16>, vector<8x512xf32> -> vector<8x512xf32>
    %52 = arith.index_cast %c1_i32 : i32 to index
    %c0_28 = arith.constant 0 : index
    %c0_29 = arith.constant 0 : index
    %53 = vector.load %arg7[%52, %c0_28, %c0_29] : memref<8x8x512xf32, #tpu.memory_space<vmem>>, vector<1x8x512xf32>
    %54 = vector.shape_cast %53 : vector<1x8x512xf32> to vector<8x512xf32>
    %55 = arith.addf %51, %54 : vector<8x512xf32>
    %56 = vector.extract_strided_slice %55 {offsets = [0, 0], sizes = [8, 128], strides = [1, 1]} : vector<8x512xf32> to vector<8x128xf32>
    %cst_30 = arith.constant 5.000000e-01 : f32
    %57 = vector.broadcast %cst_30 : f32 to vector<8x128xf32>
    %58 = arith.mulf %57, %56 : vector<8x128xf32>
    %59 = math.tanh %58 : vector<8x128xf32>
    %cst_31 = arith.constant 5.000000e-01 : f32
    %60 = vector.broadcast %cst_31 : f32 to vector<8x128xf32>
    %61 = arith.mulf %60, %59 : vector<8x128xf32>
    %cst_32 = arith.constant 5.000000e-01 : f32
    %62 = vector.broadcast %cst_32 : f32 to vector<8x128xf32>
    %63 = arith.addf %61, %62 : vector<8x128xf32>
    %64 = vector.extract_strided_slice %55 {offsets = [0, 128], sizes = [8, 128], strides = [1, 1]} : vector<8x512xf32> to vector<8x128xf32>
    %cst_33 = arith.constant 5.000000e-01 : f32
    %65 = vector.broadcast %cst_33 : f32 to vector<8x128xf32>
    %66 = arith.mulf %65, %64 : vector<8x128xf32>
    %67 = math.tanh %66 : vector<8x128xf32>
    %cst_34 = arith.constant 5.000000e-01 : f32
    %68 = vector.broadcast %cst_34 : f32 to vector<8x128xf32>
    %69 = arith.mulf %68, %67 : vector<8x128xf32>
    %cst_35 = arith.constant 5.000000e-01 : f32
    %70 = vector.broadcast %cst_35 : f32 to vector<8x128xf32>
    %71 = arith.addf %69, %70 : vector<8x128xf32>
    %72 = vector.extract_strided_slice %55 {offsets = [0, 256], sizes = [8, 128], strides = [1, 1]} : vector<8x512xf32> to vector<8x128xf32>
    %73 = math.tanh %72 : vector<8x128xf32>
    %74 = vector.extract_strided_slice %55 {offsets = [0, 384], sizes = [8, 128], strides = [1, 1]} : vector<8x512xf32> to vector<8x128xf32>
    %cst_36 = arith.constant 5.000000e-01 : f32
    %75 = vector.broadcast %cst_36 : f32 to vector<8x128xf32>
    %76 = arith.mulf %75, %74 : vector<8x128xf32>
    %77 = math.tanh %76 : vector<8x128xf32>
    %cst_37 = arith.constant 5.000000e-01 : f32
    %78 = vector.broadcast %cst_37 : f32 to vector<8x128xf32>
    %79 = arith.mulf %78, %77 : vector<8x128xf32>
    %cst_38 = arith.constant 5.000000e-01 : f32
    %80 = vector.broadcast %cst_38 : f32 to vector<8x128xf32>
    %81 = arith.addf %79, %80 : vector<8x128xf32>
    %82 = arith.mulf %71, %47 : vector<8x128xf32>
    %83 = arith.mulf %63, %73 : vector<8x128xf32>
    %84 = arith.addf %82, %83 : vector<8x128xf32>
    %85 = math.tanh %84 : vector<8x128xf32>
    %86 = arith.mulf %81, %85 : vector<8x128xf32>
    %c2_i32 = arith.constant 2 : i32
    %87 = arith.truncf %86 : vector<8x128xf32> to vector<8x128xbf16>
    %cst_39 = arith.constant dense<0.000000e+00> : vector<8x512xf32>
    %88 = tpu.matmul %87, %10, %cst_39 {dimension_numbers = #tpu.dot_dimension_numbers<[1], [0], [0], [1], [0, 0, 1, 1], [], []>} : vector<8x128xbf16>, vector<128x512xbf16>, vector<8x512xf32> -> vector<8x512xf32>
    %89 = arith.index_cast %c2_i32 : i32 to index
    %c0_40 = arith.constant 0 : index
    %c0_41 = arith.constant 0 : index
    %90 = vector.load %arg7[%89, %c0_40, %c0_41] : memref<8x8x512xf32, #tpu.memory_space<vmem>>, vector<1x8x512xf32>
    %91 = vector.shape_cast %90 : vector<1x8x512xf32> to vector<8x512xf32>
    %92 = arith.addf %88, %91 : vector<8x512xf32>
    %93 = vector.extract_strided_slice %92 {offsets = [0, 0], sizes = [8, 128], strides = [1, 1]} : vector<8x512xf32> to vector<8x128xf32>
    %cst_42 = arith.constant 5.000000e-01 : f32
    %94 = vector.broadcast %cst_42 : f32 to vector<8x128xf32>
    %95 = arith.mulf %94, %93 : vector<8x128xf32>
    %96 = math.tanh %95 : vector<8x128xf32>
    %cst_43 = arith.constant 5.000000e-01 : f32
    %97 = vector.broadcast %cst_43 : f32 to vector<8x128xf32>
    %98 = arith.mulf %97, %96 : vector<8x128xf32>
    %cst_44 = arith.constant 5.000000e-01 : f32
    %99 = vector.broadcast %cst_44 : f32 to vector<8x128xf32>
    %100 = arith.addf %98, %99 : vector<8x128xf32>
    %101 = vector.extract_strided_slice %92 {offsets = [0, 128], sizes = [8, 128], strides = [1, 1]} : vector<8x512xf32> to vector<8x128xf32>
    %cst_45 = arith.constant 5.000000e-01 : f32
    %102 = vector.broadcast %cst_45 : f32 to vector<8x128xf32>
    %103 = arith.mulf %102, %101 : vector<8x128xf32>
    %104 = math.tanh %103 : vector<8x128xf32>
    %cst_46 = arith.constant 5.000000e-01 : f32
    %105 = vector.broadcast %cst_46 : f32 to vector<8x128xf32>
    %106 = arith.mulf %105, %104 : vector<8x128xf32>
    %cst_47 = arith.constant 5.000000e-01 : f32
    %107 = vector.broadcast %cst_47 : f32 to vector<8x128xf32>
    %108 = arith.addf %106, %107 : vector<8x128xf32>
    %109 = vector.extract_strided_slice %92 {offsets = [0, 256], sizes = [8, 128], strides = [1, 1]} : vector<8x512xf32> to vector<8x128xf32>
    %110 = math.tanh %109 : vector<8x128xf32>
    %111 = vector.extract_strided_slice %92 {offsets = [0, 384], sizes = [8, 128], strides = [1, 1]} : vector<8x512xf32> to vector<8x128xf32>
    %cst_48 = arith.constant 5.000000e-01 : f32
    %112 = vector.broadcast %cst_48 : f32 to vector<8x128xf32>
    %113 = arith.mulf %112, %111 : vector<8x128xf32>
    %114 = math.tanh %113 : vector<8x128xf32>
    %cst_49 = arith.constant 5.000000e-01 : f32
    %115 = vector.broadcast %cst_49 : f32 to vector<8x128xf32>
    %116 = arith.mulf %115, %114 : vector<8x128xf32>
    %cst_50 = arith.constant 5.000000e-01 : f32
    %117 = vector.broadcast %cst_50 : f32 to vector<8x128xf32>
    %118 = arith.addf %116, %117 : vector<8x128xf32>
    %119 = arith.mulf %108, %84 : vector<8x128xf32>
    %120 = arith.mulf %100, %110 : vector<8x128xf32>
    %121 = arith.addf %119, %120 : vector<8x128xf32>
    %122 = math.tanh %121 : vector<8x128xf32>
    %123 = arith.mulf %118, %122 : vector<8x128xf32>
    %c3_i32 = arith.constant 3 : i32
    %124 = arith.truncf %123 : vector<8x128xf32> to vector<8x128xbf16>
    %cst_51 = arith.constant dense<0.000000e+00> : vector<8x512xf32>
    %125 = tpu.matmul %124, %10, %cst_51 {dimension_numbers = #tpu.dot_dimension_numbers<[1], [0], [0], [1], [0, 0, 1, 1], [], []>} : vector<8x128xbf16>, vector<128x512xbf16>, vector<8x512xf32> -> vector<8x512xf32>
    %126 = arith.index_cast %c3_i32 : i32 to index
    %c0_52 = arith.constant 0 : index
    %c0_53 = arith.constant 0 : index
    %127 = vector.load %arg7[%126, %c0_52, %c0_53] : memref<8x8x512xf32, #tpu.memory_space<vmem>>, vector<1x8x512xf32>
    %128 = vector.shape_cast %127 : vector<1x8x512xf32> to vector<8x512xf32>
    %129 = arith.addf %125, %128 : vector<8x512xf32>
    %130 = vector.extract_strided_slice %129 {offsets = [0, 0], sizes = [8, 128], strides = [1, 1]} : vector<8x512xf32> to vector<8x128xf32>
    %cst_54 = arith.constant 5.000000e-01 : f32
    %131 = vector.broadcast %cst_54 : f32 to vector<8x128xf32>
    %132 = arith.mulf %131, %130 : vector<8x128xf32>
    %133 = math.tanh %132 : vector<8x128xf32>
    %cst_55 = arith.constant 5.000000e-01 : f32
    %134 = vector.broadcast %cst_55 : f32 to vector<8x128xf32>
    %135 = arith.mulf %134, %133 : vector<8x128xf32>
    %cst_56 = arith.constant 5.000000e-01 : f32
    %136 = vector.broadcast %cst_56 : f32 to vector<8x128xf32>
    %137 = arith.addf %135, %136 : vector<8x128xf32>
    %138 = vector.extract_strided_slice %129 {offsets = [0, 128], sizes = [8, 128], strides = [1, 1]} : vector<8x512xf32> to vector<8x128xf32>
    %cst_57 = arith.constant 5.000000e-01 : f32
    %139 = vector.broadcast %cst_57 : f32 to vector<8x128xf32>
    %140 = arith.mulf %139, %138 : vector<8x128xf32>
    %141 = math.tanh %140 : vector<8x128xf32>
    %cst_58 = arith.constant 5.000000e-01 : f32
    %142 = vector.broadcast %cst_58 : f32 to vector<8x128xf32>
    %143 = arith.mulf %142, %141 : vector<8x128xf32>
    %cst_59 = arith.constant 5.000000e-01 : f32
    %144 = vector.broadcast %cst_59 : f32 to vector<8x128xf32>
    %145 = arith.addf %143, %144 : vector<8x128xf32>
    %146 = vector.extract_strided_slice %129 {offsets = [0, 256], sizes = [8, 128], strides = [1, 1]} : vector<8x512xf32> to vector<8x128xf32>
    %147 = math.tanh %146 : vector<8x128xf32>
    %148 = vector.extract_strided_slice %129 {offsets = [0, 384], sizes = [8, 128], strides = [1, 1]} : vector<8x512xf32> to vector<8x128xf32>
    %cst_60 = arith.constant 5.000000e-01 : f32
    %149 = vector.broadcast %cst_60 : f32 to vector<8x128xf32>
    %150 = arith.mulf %149, %148 : vector<8x128xf32>
    %151 = math.tanh %150 : vector<8x128xf32>
    %cst_61 = arith.constant 5.000000e-01 : f32
    %152 = vector.broadcast %cst_61 : f32 to vector<8x128xf32>
    %153 = arith.mulf %152, %151 : vector<8x128xf32>
    %cst_62 = arith.constant 5.000000e-01 : f32
    %154 = vector.broadcast %cst_62 : f32 to vector<8x128xf32>
    %155 = arith.addf %153, %154 : vector<8x128xf32>
    %156 = arith.mulf %145, %121 : vector<8x128xf32>
    %157 = arith.mulf %137, %147 : vector<8x128xf32>
    %158 = arith.addf %156, %157 : vector<8x128xf32>
    %159 = math.tanh %158 : vector<8x128xf32>
    %160 = arith.mulf %155, %159 : vector<8x128xf32>
    %c4_i32 = arith.constant 4 : i32
    %161 = arith.truncf %160 : vector<8x128xf32> to vector<8x128xbf16>
    %cst_63 = arith.constant dense<0.000000e+00> : vector<8x512xf32>
    %162 = tpu.matmul %161, %10, %cst_63 {dimension_numbers = #tpu.dot_dimension_numbers<[1], [0], [0], [1], [0, 0, 1, 1], [], []>} : vector<8x128xbf16>, vector<128x512xbf16>, vector<8x512xf32> -> vector<8x512xf32>
    %163 = arith.index_cast %c4_i32 : i32 to index
    %c0_64 = arith.constant 0 : index
    %c0_65 = arith.constant 0 : index
    %164 = vector.load %arg7[%163, %c0_64, %c0_65] : memref<8x8x512xf32, #tpu.memory_space<vmem>>, vector<1x8x512xf32>
    %165 = vector.shape_cast %164 : vector<1x8x512xf32> to vector<8x512xf32>
    %166 = arith.addf %162, %165 : vector<8x512xf32>
    %167 = vector.extract_strided_slice %166 {offsets = [0, 0], sizes = [8, 128], strides = [1, 1]} : vector<8x512xf32> to vector<8x128xf32>
    %cst_66 = arith.constant 5.000000e-01 : f32
    %168 = vector.broadcast %cst_66 : f32 to vector<8x128xf32>
    %169 = arith.mulf %168, %167 : vector<8x128xf32>
    %170 = math.tanh %169 : vector<8x128xf32>
    %cst_67 = arith.constant 5.000000e-01 : f32
    %171 = vector.broadcast %cst_67 : f32 to vector<8x128xf32>
    %172 = arith.mulf %171, %170 : vector<8x128xf32>
    %cst_68 = arith.constant 5.000000e-01 : f32
    %173 = vector.broadcast %cst_68 : f32 to vector<8x128xf32>
    %174 = arith.addf %172, %173 : vector<8x128xf32>
    %175 = vector.extract_strided_slice %166 {offsets = [0, 128], sizes = [8, 128], strides = [1, 1]} : vector<8x512xf32> to vector<8x128xf32>
    %cst_69 = arith.constant 5.000000e-01 : f32
    %176 = vector.broadcast %cst_69 : f32 to vector<8x128xf32>
    %177 = arith.mulf %176, %175 : vector<8x128xf32>
    %178 = math.tanh %177 : vector<8x128xf32>
    %cst_70 = arith.constant 5.000000e-01 : f32
    %179 = vector.broadcast %cst_70 : f32 to vector<8x128xf32>
    %180 = arith.mulf %179, %178 : vector<8x128xf32>
    %cst_71 = arith.constant 5.000000e-01 : f32
    %181 = vector.broadcast %cst_71 : f32 to vector<8x128xf32>
    %182 = arith.addf %180, %181 : vector<8x128xf32>
    %183 = vector.extract_strided_slice %166 {offsets = [0, 256], sizes = [8, 128], strides = [1, 1]} : vector<8x512xf32> to vector<8x128xf32>
    %184 = math.tanh %183 : vector<8x128xf32>
    %185 = vector.extract_strided_slice %166 {offsets = [0, 384], sizes = [8, 128], strides = [1, 1]} : vector<8x512xf32> to vector<8x128xf32>
    %cst_72 = arith.constant 5.000000e-01 : f32
    %186 = vector.broadcast %cst_72 : f32 to vector<8x128xf32>
    %187 = arith.mulf %186, %185 : vector<8x128xf32>
    %188 = math.tanh %187 : vector<8x128xf32>
    %cst_73 = arith.constant 5.000000e-01 : f32
    %189 = vector.broadcast %cst_73 : f32 to vector<8x128xf32>
    %190 = arith.mulf %189, %188 : vector<8x128xf32>
    %cst_74 = arith.constant 5.000000e-01 : f32
    %191 = vector.broadcast %cst_74 : f32 to vector<8x128xf32>
    %192 = arith.addf %190, %191 : vector<8x128xf32>
    %193 = arith.mulf %182, %158 : vector<8x128xf32>
    %194 = arith.mulf %174, %184 : vector<8x128xf32>
    %195 = arith.addf %193, %194 : vector<8x128xf32>
    %196 = math.tanh %195 : vector<8x128xf32>
    %197 = arith.mulf %192, %196 : vector<8x128xf32>
    %c5_i32 = arith.constant 5 : i32
    %198 = arith.truncf %197 : vector<8x128xf32> to vector<8x128xbf16>
    %cst_75 = arith.constant dense<0.000000e+00> : vector<8x512xf32>
    %199 = tpu.matmul %198, %10, %cst_75 {dimension_numbers = #tpu.dot_dimension_numbers<[1], [0], [0], [1], [0, 0, 1, 1], [], []>} : vector<8x128xbf16>, vector<128x512xbf16>, vector<8x512xf32> -> vector<8x512xf32>
    %200 = arith.index_cast %c5_i32 : i32 to index
    %c0_76 = arith.constant 0 : index
    %c0_77 = arith.constant 0 : index
    %201 = vector.load %arg7[%200, %c0_76, %c0_77] : memref<8x8x512xf32, #tpu.memory_space<vmem>>, vector<1x8x512xf32>
    %202 = vector.shape_cast %201 : vector<1x8x512xf32> to vector<8x512xf32>
    %203 = arith.addf %199, %202 : vector<8x512xf32>
    %204 = vector.extract_strided_slice %203 {offsets = [0, 0], sizes = [8, 128], strides = [1, 1]} : vector<8x512xf32> to vector<8x128xf32>
    %cst_78 = arith.constant 5.000000e-01 : f32
    %205 = vector.broadcast %cst_78 : f32 to vector<8x128xf32>
    %206 = arith.mulf %205, %204 : vector<8x128xf32>
    %207 = math.tanh %206 : vector<8x128xf32>
    %cst_79 = arith.constant 5.000000e-01 : f32
    %208 = vector.broadcast %cst_79 : f32 to vector<8x128xf32>
    %209 = arith.mulf %208, %207 : vector<8x128xf32>
    %cst_80 = arith.constant 5.000000e-01 : f32
    %210 = vector.broadcast %cst_80 : f32 to vector<8x128xf32>
    %211 = arith.addf %209, %210 : vector<8x128xf32>
    %212 = vector.extract_strided_slice %203 {offsets = [0, 128], sizes = [8, 128], strides = [1, 1]} : vector<8x512xf32> to vector<8x128xf32>
    %cst_81 = arith.constant 5.000000e-01 : f32
    %213 = vector.broadcast %cst_81 : f32 to vector<8x128xf32>
    %214 = arith.mulf %213, %212 : vector<8x128xf32>
    %215 = math.tanh %214 : vector<8x128xf32>
    %cst_82 = arith.constant 5.000000e-01 : f32
    %216 = vector.broadcast %cst_82 : f32 to vector<8x128xf32>
    %217 = arith.mulf %216, %215 : vector<8x128xf32>
    %cst_83 = arith.constant 5.000000e-01 : f32
    %218 = vector.broadcast %cst_83 : f32 to vector<8x128xf32>
    %219 = arith.addf %217, %218 : vector<8x128xf32>
    %220 = vector.extract_strided_slice %203 {offsets = [0, 256], sizes = [8, 128], strides = [1, 1]} : vector<8x512xf32> to vector<8x128xf32>
    %221 = math.tanh %220 : vector<8x128xf32>
    %222 = vector.extract_strided_slice %203 {offsets = [0, 384], sizes = [8, 128], strides = [1, 1]} : vector<8x512xf32> to vector<8x128xf32>
    %cst_84 = arith.constant 5.000000e-01 : f32
    %223 = vector.broadcast %cst_84 : f32 to vector<8x128xf32>
    %224 = arith.mulf %223, %222 : vector<8x128xf32>
    %225 = math.tanh %224 : vector<8x128xf32>
    %cst_85 = arith.constant 5.000000e-01 : f32
    %226 = vector.broadcast %cst_85 : f32 to vector<8x128xf32>
    %227 = arith.mulf %226, %225 : vector<8x128xf32>
    %cst_86 = arith.constant 5.000000e-01 : f32
    %228 = vector.broadcast %cst_86 : f32 to vector<8x128xf32>
    %229 = arith.addf %227, %228 : vector<8x128xf32>
    %230 = arith.mulf %219, %195 : vector<8x128xf32>
    %231 = arith.mulf %211, %221 : vector<8x128xf32>
    %232 = arith.addf %230, %231 : vector<8x128xf32>
    %233 = math.tanh %232 : vector<8x128xf32>
    %234 = arith.mulf %229, %233 : vector<8x128xf32>
    %c6_i32 = arith.constant 6 : i32
    %235 = arith.truncf %234 : vector<8x128xf32> to vector<8x128xbf16>
    %cst_87 = arith.constant dense<0.000000e+00> : vector<8x512xf32>
    %236 = tpu.matmul %235, %10, %cst_87 {dimension_numbers = #tpu.dot_dimension_numbers<[1], [0], [0], [1], [0, 0, 1, 1], [], []>} : vector<8x128xbf16>, vector<128x512xbf16>, vector<8x512xf32> -> vector<8x512xf32>
    %237 = arith.index_cast %c6_i32 : i32 to index
    %c0_88 = arith.constant 0 : index
    %c0_89 = arith.constant 0 : index
    %238 = vector.load %arg7[%237, %c0_88, %c0_89] : memref<8x8x512xf32, #tpu.memory_space<vmem>>, vector<1x8x512xf32>
    %239 = vector.shape_cast %238 : vector<1x8x512xf32> to vector<8x512xf32>
    %240 = arith.addf %236, %239 : vector<8x512xf32>
    %241 = vector.extract_strided_slice %240 {offsets = [0, 0], sizes = [8, 128], strides = [1, 1]} : vector<8x512xf32> to vector<8x128xf32>
    %cst_90 = arith.constant 5.000000e-01 : f32
    %242 = vector.broadcast %cst_90 : f32 to vector<8x128xf32>
    %243 = arith.mulf %242, %241 : vector<8x128xf32>
    %244 = math.tanh %243 : vector<8x128xf32>
    %cst_91 = arith.constant 5.000000e-01 : f32
    %245 = vector.broadcast %cst_91 : f32 to vector<8x128xf32>
    %246 = arith.mulf %245, %244 : vector<8x128xf32>
    %cst_92 = arith.constant 5.000000e-01 : f32
    %247 = vector.broadcast %cst_92 : f32 to vector<8x128xf32>
    %248 = arith.addf %246, %247 : vector<8x128xf32>
    %249 = vector.extract_strided_slice %240 {offsets = [0, 128], sizes = [8, 128], strides = [1, 1]} : vector<8x512xf32> to vector<8x128xf32>
    %cst_93 = arith.constant 5.000000e-01 : f32
    %250 = vector.broadcast %cst_93 : f32 to vector<8x128xf32>
    %251 = arith.mulf %250, %249 : vector<8x128xf32>
    %252 = math.tanh %251 : vector<8x128xf32>
    %cst_94 = arith.constant 5.000000e-01 : f32
    %253 = vector.broadcast %cst_94 : f32 to vector<8x128xf32>
    %254 = arith.mulf %253, %252 : vector<8x128xf32>
    %cst_95 = arith.constant 5.000000e-01 : f32
    %255 = vector.broadcast %cst_95 : f32 to vector<8x128xf32>
    %256 = arith.addf %254, %255 : vector<8x128xf32>
    %257 = vector.extract_strided_slice %240 {offsets = [0, 256], sizes = [8, 128], strides = [1, 1]} : vector<8x512xf32> to vector<8x128xf32>
    %258 = math.tanh %257 : vector<8x128xf32>
    %259 = vector.extract_strided_slice %240 {offsets = [0, 384], sizes = [8, 128], strides = [1, 1]} : vector<8x512xf32> to vector<8x128xf32>
    %cst_96 = arith.constant 5.000000e-01 : f32
    %260 = vector.broadcast %cst_96 : f32 to vector<8x128xf32>
    %261 = arith.mulf %260, %259 : vector<8x128xf32>
    %262 = math.tanh %261 : vector<8x128xf32>
    %cst_97 = arith.constant 5.000000e-01 : f32
    %263 = vector.broadcast %cst_97 : f32 to vector<8x128xf32>
    %264 = arith.mulf %263, %262 : vector<8x128xf32>
    %cst_98 = arith.constant 5.000000e-01 : f32
    %265 = vector.broadcast %cst_98 : f32 to vector<8x128xf32>
    %266 = arith.addf %264, %265 : vector<8x128xf32>
    %267 = arith.mulf %256, %232 : vector<8x128xf32>
    %268 = arith.mulf %248, %258 : vector<8x128xf32>
    %269 = arith.addf %267, %268 : vector<8x128xf32>
    %270 = math.tanh %269 : vector<8x128xf32>
    %271 = arith.mulf %266, %270 : vector<8x128xf32>
    %c7_i32 = arith.constant 7 : i32
    %272 = arith.truncf %271 : vector<8x128xf32> to vector<8x128xbf16>
    %cst_99 = arith.constant dense<0.000000e+00> : vector<8x512xf32>
    %273 = tpu.matmul %272, %10, %cst_99 {dimension_numbers = #tpu.dot_dimension_numbers<[1], [0], [0], [1], [0, 0, 1, 1], [], []>} : vector<8x128xbf16>, vector<128x512xbf16>, vector<8x512xf32> -> vector<8x512xf32>
    %274 = arith.index_cast %c7_i32 : i32 to index
    %c0_100 = arith.constant 0 : index
    %c0_101 = arith.constant 0 : index
    %275 = vector.load %arg7[%274, %c0_100, %c0_101] : memref<8x8x512xf32, #tpu.memory_space<vmem>>, vector<1x8x512xf32>
    %276 = vector.shape_cast %275 : vector<1x8x512xf32> to vector<8x512xf32>
    %277 = arith.addf %273, %276 : vector<8x512xf32>
    %278 = vector.extract_strided_slice %277 {offsets = [0, 0], sizes = [8, 128], strides = [1, 1]} : vector<8x512xf32> to vector<8x128xf32>
    %cst_102 = arith.constant 5.000000e-01 : f32
    %279 = vector.broadcast %cst_102 : f32 to vector<8x128xf32>
    %280 = arith.mulf %279, %278 : vector<8x128xf32>
    %281 = math.tanh %280 : vector<8x128xf32>
    %cst_103 = arith.constant 5.000000e-01 : f32
    %282 = vector.broadcast %cst_103 : f32 to vector<8x128xf32>
    %283 = arith.mulf %282, %281 : vector<8x128xf32>
    %cst_104 = arith.constant 5.000000e-01 : f32
    %284 = vector.broadcast %cst_104 : f32 to vector<8x128xf32>
    %285 = arith.addf %283, %284 : vector<8x128xf32>
    %286 = vector.extract_strided_slice %277 {offsets = [0, 128], sizes = [8, 128], strides = [1, 1]} : vector<8x512xf32> to vector<8x128xf32>
    %cst_105 = arith.constant 5.000000e-01 : f32
    %287 = vector.broadcast %cst_105 : f32 to vector<8x128xf32>
    %288 = arith.mulf %287, %286 : vector<8x128xf32>
    %289 = math.tanh %288 : vector<8x128xf32>
    %cst_106 = arith.constant 5.000000e-01 : f32
    %290 = vector.broadcast %cst_106 : f32 to vector<8x128xf32>
    %291 = arith.mulf %290, %289 : vector<8x128xf32>
    %cst_107 = arith.constant 5.000000e-01 : f32
    %292 = vector.broadcast %cst_107 : f32 to vector<8x128xf32>
    %293 = arith.addf %291, %292 : vector<8x128xf32>
    %294 = vector.extract_strided_slice %277 {offsets = [0, 256], sizes = [8, 128], strides = [1, 1]} : vector<8x512xf32> to vector<8x128xf32>
    %295 = math.tanh %294 : vector<8x128xf32>
    %296 = vector.extract_strided_slice %277 {offsets = [0, 384], sizes = [8, 128], strides = [1, 1]} : vector<8x512xf32> to vector<8x128xf32>
    %cst_108 = arith.constant 5.000000e-01 : f32
    %297 = vector.broadcast %cst_108 : f32 to vector<8x128xf32>
    %298 = arith.mulf %297, %296 : vector<8x128xf32>
    %299 = math.tanh %298 : vector<8x128xf32>
    %cst_109 = arith.constant 5.000000e-01 : f32
    %300 = vector.broadcast %cst_109 : f32 to vector<8x128xf32>
    %301 = arith.mulf %300, %299 : vector<8x128xf32>
    %cst_110 = arith.constant 5.000000e-01 : f32
    %302 = vector.broadcast %cst_110 : f32 to vector<8x128xf32>
    %303 = arith.addf %301, %302 : vector<8x128xf32>
    %304 = arith.mulf %293, %269 : vector<8x128xf32>
    %305 = arith.mulf %285, %295 : vector<8x128xf32>
    %306 = arith.addf %304, %305 : vector<8x128xf32>
    %307 = math.tanh %306 : vector<8x128xf32>
    %308 = arith.mulf %303, %307 : vector<8x128xf32>
    %c8_i32 = arith.constant 8 : i32
    %c0_111 = arith.constant 0 : index
    %c0_112 = arith.constant 0 : index
    %309 = vector.load %arg8[%c0_111, %c0_112] : memref<8x128xf32, #tpu.memory_space<vmem>>, vector<8x128xf32>
    tpu.vector_store %arg8[%c0_111, %c0_112], %308 {strides = array<i32>} : memref<8x128xf32, #tpu.memory_space<vmem>>, vector<8x128xf32>,
    %c0_113 = arith.constant 0 : index
    %c0_114 = arith.constant 0 : index
    %310 = vector.load %arg9[%c0_113, %c0_114] : memref<8x128xf32, #tpu.memory_space<vmem>>, vector<8x128xf32>
    tpu.vector_store %arg9[%c0_113, %c0_114], %306 {strides = array<i32>} : memref<8x128xf32, #tpu.memory_space<vmem>>, vector<8x128xf32>,
    %c0_i32_115 = arith.constant 0 : i32
    %311 = arith.cmpi eq, %arg1, %c0_i32_115 : i32
    %312 = arith.extui %311 : i1 to i32
    %c0_i32_116 = arith.constant 0 : i32
    %313 = arith.cmpi ne, %312, %c0_i32_116 : i32
    scf.if %313 {
      %c0_117 = arith.constant 0 : index
      %c0_118 = arith.constant 0 : index
      %314 = vector.load %arg8[%c0_117, %c0_118] : memref<8x128xf32, #tpu.memory_space<vmem>>, vector<8x128xf32>
      %c0_119 = arith.constant 0 : index
      %c0_120 = arith.constant 0 : index
      %315 = vector.load %arg5[%c0_119, %c0_120] : memref<8x128xf32, #tpu.memory_space<vmem>>, vector<8x128xf32>
      tpu.vector_store %arg5[%c0_119, %c0_120], %314 {strides = array<i32>} : memref<8x128xf32, #tpu.memory_space<vmem>>, vector<8x128xf32>,
      %c0_121 = arith.constant 0 : index
      %c0_122 = arith.constant 0 : index
      %316 = vector.load %arg9[%c0_121, %c0_122] : memref<8x128xf32, #tpu.memory_space<vmem>>, vector<8x128xf32>
      %c0_123 = arith.constant 0 : index
      %c0_124 = arith.constant 0 : index
      %317 = vector.load %arg6[%c0_123, %c0_124] : memref<8x128xf32, #tpu.memory_space<vmem>>, vector<8x128xf32>
      tpu.vector_store %arg6[%c0_123, %c0_124], %316 {strides = array<i32>} : memref<8x128xf32, #tpu.memory_space<vmem>>, vector<8x128xf32>,
    } else {
    }
    return
  }
  func.func @transform_0(%arg0: i32, %arg1: i32) -> (i32, i32, i32) {
    %c0_i32 = arith.constant 0 : i32
    %c0_i32_0 = arith.constant 0 : i32
    return %arg1, %arg0, %c0_i32 : i32, i32, i32
  }
  func.func @transform_1(%arg0: i32, %arg1: i32) -> (i32, i32) {
    %c0_i32 = arith.constant 0 : i32
    %c0_i32_0 = arith.constant 0 : i32
    %c0_i32_1 = arith.constant 0 : i32
    return %c0_i32, %c0_i32_0 : i32, i32
  }
  func.func @transform_2(%arg0: i32, %arg1: i32) -> (i32, i32) {
    %c0_i32 = arith.constant 0 : i32
    %c0_i32_0 = arith.constant 0 : i32
    %c0_i32_1 = arith.constant 0 : i32
    return %c0_i32, %c0_i32_0 : i32, i32
  }
  func.func @transform_3(%arg0: i32, %arg1: i32) -> (i32, i32) {
    %c0_i32 = arith.constant 0 : i32
    %c0_i32_0 = arith.constant 0 : i32
    return %arg0, %c0_i32 : i32, i32
  }
  func.func @transform_4(%arg0: i32, %arg1: i32) -> (i32, i32) {
    %c0_i32 = arith.constant 0 : i32
    %c0_i32_0 = arith.constant 0 : i32
    return %arg0, %c0_i32 : i32, i32
  }
}

</mosaic_0001>

<llo_original>
// kernel: mylstm_forward.1
$region0: #{mylstm_forward.1}
  #allocation0 [shape = 'u32[]', space=smem, size = 0x4, offset = 0x4, fixed_abs, tag = 'smem constant byte address 0x4 - core index']
  #allocation1 [shape = 'u32[144,128]{1,0:T(1,128)}', space=vmem, size = 0x12000, scoped, tag = 'internal scratch']
  #allocation2 [shape = 'f32[8,8,512]{2,1,0:T(8,128)}', space=vmem, size = 0x20000, scoped, tag = 'scratch operand']
  #allocation3 [shape = 'f32[8,128]{1,0:T(8,128)}', space=vmem, size = 0x1000, scoped, tag = 'scratch operand']
  #allocation4 [shape = 'f32[8,128]{1,0:T(8,128)}', space=vmem, size = 0x1000, scoped, tag = 'scratch operand']
  %s0 = inlined_call_operand.vmem [shape: f32[8,8,8], index: 0, kind: input, shape index: {}]
  %s1 = inlined_call_operand.vmem [shape: bf16[8,512], index: 1, kind: input, shape index: {}]
  %s2 = inlined_call_operand.vmem [shape: bf16[128,512], index: 2, kind: input, shape index: {}]
  %s3 = inlined_call_operand.vmem [shape: f32[8,128], index: 3, kind: output, shape index: {0}]
  %s4 = inlined_call_operand.vmem [shape: f32[8,128], index: 4, kind: output, shape index: {1}]
  %5 = xla_tuple %s3, %s4
  %s6 = sld [smem:[#allocation0]]
  $region38: #{mylstm_forward.1} parent=0
    _
  %s8 = ssub.s32 1, %s6
  %s9 = scalar_select 0, %s8, %s6
  // Predicated region
  $region2: #{mylstm_forward.1} parent=0 // pred_check
    _
  $region3: #{mylstm_forward.1} parent=0 // pred_check_branch
    %11 = sbr.rel (0) target = $region5
  $region4: #{mylstm_forward.1} parent=0 // pred_region
    _
  $region5: #{mylstm_forward.1} parent=0 // pred_fallthru
    _
  // Predicated region
  $region6: #{mylstm_forward.1} parent=0 // pred_check
    _
  $region7: #{mylstm_forward.1} parent=0 // pred_check_branch
    %13 = sbr.rel (0) target = $region9
  $region8: #{mylstm_forward.1} parent=0 // pred_region
    _
  $region9: #{mylstm_forward.1} parent=0 // pred_fallthru
    _
  // Predicated region
  $region10: #{mylstm_forward.1} parent=0 // pred_check
    _
  $region11: #{mylstm_forward.1} parent=0 // pred_check_branch
    %15 = sbr.rel (0) target = $region13
  $region12: #{mylstm_forward.1} parent=0 // pred_region
    _
  $region13: #{mylstm_forward.1} parent=0 // pred_fallthru
    _
  %p17 = scmp.eq.s32.totalorder 0, 0
  // Predicated region
  $region14: #{mylstm_forward.1} parent=0 // pred_check
    %p18 = pneg %p17
  $region15: #{mylstm_forward.1} parent=0 // pred_check_branch
    %20 = sbr.rel (%p18) target = $region17
  $region16: #{mylstm_forward.1} parent=0 // pred_region
    %21 = vst [vmem:[#allocation3] sm:$0xff] 0.0
    %22 = vst [vmem:[#allocation4] sm:$0xff] 0.0
  $region17: #{mylstm_forward.1} parent=0 // pred_fallthru
    _
  %v23 = vld [vmem:[%s0] sm:$0xff]
  %v24 = vld [vmem:[%s0 + $0x8] sm:$0xff]
  %v25 = vld [vmem:[%s0 + $0x10] sm:$0xff]
  %v26 = vld [vmem:[%s0 + $0x18] sm:$0xff]
  %v27 = vld [vmem:[%s0 + $0x20] sm:$0xff]
  %v28 = vld [vmem:[%s0 + $0x28] sm:$0xff]
  %v29 = vld [vmem:[%s0 + $0x30] sm:$0xff]
  %v30 = vld [vmem:[%s0 + $0x38] sm:$0xff]
  %v31 = vpack.c.bf16 %v23, %v23
  %v32 = vpack.c.bf16 %v24, %v24
  %v33 = vpack.c.bf16 %v25, %v25
  %v34 = vpack.c.bf16 %v26, %v26
  %v35 = vpack.c.bf16 %v27, %v27
  %v36 = vpack.c.bf16 %v28, %v28
  %v37 = vpack.c.bf16 %v29, %v29
  %v38 = vpack.c.bf16 %v30, %v30
  %v39 = vld [vmem:[%s1] sm:$0xff]
  %v40 = vld [vmem:[%s1 + $0x8] sm:$0xff]
  %v49 = vunpack.c.l.b16 %v31
  %v50 = vunpack.c.l.b16 %v32
  %v51 = vunpack.c.l.b16 %v33
  %v52 = vunpack.c.l.b16 %v34
  %v53 = vunpack.c.l.b16 %v35
  %v54 = vunpack.c.l.b16 %v36
  %v55 = vunpack.c.l.b16 %v37
  %v56 = vunpack.c.l.b16 %v38
  %v57 = vpack.c.b16 %v50, %v49
  %v58 = vpack.c.b16 %v52, %v51
  %v59 = vpack.c.b16 %v54, %v53
  %v60 = vpack.c.b16 %v56, %v55
  %v63 = vunpack.c.l.b16 %v39
  %v64 = vunpack.c.h.b16 %v39
  %v65 = vunpack.c.l.b16 %v40
  %v66 = vunpack.c.h.b16 %v40
  %v67 = vpack.c.b16 %v63, %v63
  %v68 = vpack.c.b16 %v64, %v64
  %v69 = vpack.c.b16 %v65, %v65
  %v70 = vpack.c.b16 %v66, %v66
  %vm71 = vcmask 64512
  %v73 = vsel %vm71, %v57, 0
  %v76 = vsel %vm71, %v58, 0
  %v79 = vsel %vm71, %v59, 0
  %v82 = vsel %vm71, %v60, 0
  %vm84 = vcmask 1043456
  %v86 = vsel %vm84, %v67, 0
  %v89 = vsel %vm84, %v68, 0
  %v92 = vsel %vm84, %v69, 0
  %v95 = vsel %vm84, %v70, 0
  %97 = vmatprep.subr.bf16.mxu0 %v89
  %98 = vmatpush1.bf16.msra.mxu0 %v86
  %99 = vmatprep.subr.bf16.mxu0 0
  %100 = vmatpush1.bf16.msra.mxu0 0
  %101 = vmatprep.subr.bf16.mxu0 0
  %102 = vmatpush1.bf16.msra.mxu0 0
  %103 = vmatprep.subr.bf16.mxu0 0
  %104 = vmatpush1.bf16.msra.mxu0 0
  %105 = vmatprep.subr.bf16.mxu0 0
  %106 = vmatpush1.bf16.msra.mxu0 0
  %107 = vmatprep.subr.bf16.mxu0 0
  %108 = vmatpush1.bf16.msra.mxu0 0
  %109 = vmatprep.subr.bf16.mxu0 0
  %110 = vmatpush1.bf16.msra.mxu0 0
  %111 = vmatprep.subr.bf16.mxu0 0
  %112 = vmatpush1.bf16.msra.mxu0 0
  %113 = vmatprep.subr.bf16.mxu0 0
  %114 = vmatpush1.bf16.msra.mxu0 0
  %115 = vmatprep.subr.bf16.mxu0 0
  %116 = vmatpush1.bf16.msra.mxu0 0
  %117 = vmatprep.subr.bf16.mxu0 0
  %118 = vmatpush1.bf16.msra.mxu0 0
  %119 = vmatprep.subr.bf16.mxu0 0
  %120 = vmatpush1.bf16.msra.mxu0 0
  %121 = vmatprep.subr.bf16.mxu0 0
  %122 = vmatpush1.bf16.msra.mxu0 0
  %123 = vmatprep.subr.bf16.mxu0 0
  %124 = vmatpush1.bf16.msra.mxu0 0
  %125 = vmatprep.subr.bf16.mxu0 0
  %126 = vmatpush1.bf16.msra.mxu0 0
  %127 = vmatprep.subr.bf16.mxu0 0
  %128 = vmatpush1.bf16.msra.mxu0 0
  %129 = vmatprep.mubr.bf16.mxu0 0
  %130 = vmatmul.mubr.bf16.gmra.mrb[0].mxu0 %v73
  %v131 = vpop.f32.mrb[0].mxu0
  %v132 = vadd.f32 0.0, %v131
  %v133 = vpop.f32.mrb[0].mxu0
  %v134 = vadd.f32 0.0, %v133
  %v135 = vpop.f32.mrb[0].mxu0
  %v136 = vadd.f32 0.0, %v135
  %v137 = vpop.f32.mrb[0].mxu0
  %v138 = vadd.f32 0.0, %v137
  %139 = vmatprep.mubr.bf16.mxu0 0
  %140 = vmatmul.mubr.bf16.gmra.mrb[0].mxu0 %v76
  %v141 = vpop.f32.mrb[0].mxu0
  %v142 = vadd.f32 0.0, %v141
  %v143 = vpop.f32.mrb[0].mxu0
  %v144 = vadd.f32 0.0, %v143
  %v145 = vpop.f32.mrb[0].mxu0
  %v146 = vadd.f32 0.0, %v145
  %v147 = vpop.f32.mrb[0].mxu0
  %v148 = vadd.f32 0.0, %v147
  %149 = vmatprep.mubr.bf16.mxu0 0
  %150 = vmatmul.mubr.bf16.gmra.mrb[0].mxu0 %v79
  %v151 = vpop.f32.mrb[0].mxu0
  %v152 = vadd.f32 0.0, %v151
  %v153 = vpop.f32.mrb[0].mxu0
  %v154 = vadd.f32 0.0, %v153
  %v155 = vpop.f32.mrb[0].mxu0
  %v156 = vadd.f32 0.0, %v155
  %v157 = vpop.f32.mrb[0].mxu0
  %v158 = vadd.f32 0.0, %v157
  %159 = vmatprep.mubr.bf16.mxu0 0
  %160 = vmatmul.mubr.bf16.gmra.mrb[0].mxu0 %v82
  %v161 = vpop.f32.mrb[0].mxu0
  %v162 = vadd.f32 0.0, %v161
  %v163 = vpop.f32.mrb[0].mxu0
  %v164 = vadd.f32 0.0, %v163
  %v165 = vpop.f32.mrb[0].mxu0
  %v166 = vadd.f32 0.0, %v165
  %v167 = vpop.f32.mrb[0].mxu0
  %v168 = vadd.f32 0.0, %v167
  %169 = vdwg.mxu0
  %170 = vmatprep.subr.bf16.mxu0 %v95
  %171 = vmatpush1.bf16.msra.mxu0 %v92
  %172 = vmatprep.subr.bf16.mxu0 0
  %173 = vmatpush1.bf16.msra.mxu0 0
  %174 = vmatprep.subr.bf16.mxu0 0
  %175 = vmatpush1.bf16.msra.mxu0 0
  %176 = vmatprep.subr.bf16.mxu0 0
  %177 = vmatpush1.bf16.msra.mxu0 0
  %178 = vmatprep.subr.bf16.mxu0 0
  %179 = vmatpush1.bf16.msra.mxu0 0
  %180 = vmatprep.subr.bf16.mxu0 0
  %181 = vmatpush1.bf16.msra.mxu0 0
  %182 = vmatprep.subr.bf16.mxu0 0
  %183 = vmatpush1.bf16.msra.mxu0 0
  %184 = vmatprep.subr.bf16.mxu0 0
  %185 = vmatpush1.bf16.msra.mxu0 0
  %186 = vmatprep.subr.bf16.mxu0 0
  %187 = vmatpush1.bf16.msra.mxu0 0
  %188 = vmatprep.subr.bf16.mxu0 0
  %189 = vmatpush1.bf16.msra.mxu0 0
  %190 = vmatprep.subr.bf16.mxu0 0
  %191 = vmatpush1.bf16.msra.mxu0 0
  %192 = vmatprep.subr.bf16.mxu0 0
  %193 = vmatpush1.bf16.msra.mxu0 0
  %194 = vmatprep.subr.bf16.mxu0 0
  %195 = vmatpush1.bf16.msra.mxu0 0
  %196 = vmatprep.subr.bf16.mxu0 0
  %197 = vmatpush1.bf16.msra.mxu0 0
  %198 = vmatprep.subr.bf16.mxu0 0
  %199 = vmatpush1.bf16.msra.mxu0 0
  %200 = vmatprep.subr.bf16.mxu0 0
  %201 = vmatpush1.bf16.msra.mxu0 0
  %202 = vmatprep.mubr.bf16.mxu0 0
  %203 = vmatmul.mubr.bf16.gmra.mrb[0].mxu0 %v73
  %v204 = vpop.f32.mrb[0].mxu0
  %v205 = vadd.f32 0.0, %v204
  %v206 = vpop.f32.mrb[0].mxu0
  %v207 = vadd.f32 0.0, %v206
  %v208 = vpop.f32.mrb[0].mxu0
  %v209 = vadd.f32 0.0, %v208
  %v210 = vpop.f32.mrb[0].mxu0
  %v211 = vadd.f32 0.0, %v210
  %212 = vmatprep.mubr.bf16.mxu0 0
  %213 = vmatmul.mubr.bf16.gmra.mrb[0].mxu0 %v76
  %v214 = vpop.f32.mrb[0].mxu0
  %v215 = vadd.f32 0.0, %v214
  %v216 = vpop.f32.mrb[0].mxu0
  %v217 = vadd.f32 0.0, %v216
  %v218 = vpop.f32.mrb[0].mxu0
  %v219 = vadd.f32 0.0, %v218
  %v220 = vpop.f32.mrb[0].mxu0
  %v221 = vadd.f32 0.0, %v220
  %222 = vmatprep.mubr.bf16.mxu0 0
  %223 = vmatmul.mubr.bf16.gmra.mrb[0].mxu0 %v79
  %v224 = vpop.f32.mrb[0].mxu0
  %v225 = vadd.f32 0.0, %v224
  %v226 = vpop.f32.mrb[0].mxu0
  %v227 = vadd.f32 0.0, %v226
  %v228 = vpop.f32.mrb[0].mxu0
  %v229 = vadd.f32 0.0, %v228
  %v230 = vpop.f32.mrb[0].mxu0
  %v231 = vadd.f32 0.0, %v230
  %232 = vmatprep.mubr.bf16.mxu0 0
  %233 = vmatmul.mubr.bf16.gmra.mrb[0].mxu0 %v82
  %v234 = vpop.f32.mrb[0].mxu0
  %v235 = vadd.f32 0.0, %v234
  %v236 = vpop.f32.mrb[0].mxu0
  %v237 = vadd.f32 0.0, %v236
  %v238 = vpop.f32.mrb[0].mxu0
  %v239 = vadd.f32 0.0, %v238
  %v240 = vpop.f32.mrb[0].mxu0
  %v241 = vadd.f32 0.0, %v240
  %242 = vdwg.mxu0
  %243 = vst [vmem:[#allocation2] sm:$0xff] %v132
  %244 = vst [vmem:[#allocation2 + $0x8] sm:$0xff] %v134
  %245 = vst [vmem:[#allocation2 + $0x10] sm:$0xff] %v205
  %246 = vst [vmem:[#allocation2 + $0x18] sm:$0xff] %v207
  %247 = vst [vmem:[#allocation2 + $0x20] sm:$0xff] %v136
  %248 = vst [vmem:[#allocation2 + $0x28] sm:$0xff] %v138
  %249 = vst [vmem:[#allocation2 + $0x30] sm:$0xff] %v209
  %250 = vst [vmem:[#allocation2 + $0x38] sm:$0xff] %v211
  %251 = vst [vmem:[#allocation2 + $0x40] sm:$0xff] %v142
  %252 = vst [vmem:[#allocation2 + $0x48] sm:$0xff] %v144
  %253 = vst [vmem:[#allocation2 + $0x50] sm:$0xff] %v215
  %254 = vst [vmem:[#allocation2 + $0x58] sm:$0xff] %v217
  %255 = vst [vmem:[#allocation2 + $0x60] sm:$0xff] %v146
  %256 = vst [vmem:[#allocation2 + $0x68] sm:$0xff] %v148
  %257 = vst [vmem:[#allocation2 + $0x70] sm:$0xff] %v219
  %258 = vst [vmem:[#allocation2 + $0x78] sm:$0xff] %v221
  %259 = vst [vmem:[#allocation2 + $0x80] sm:$0xff] %v152
  %260 = vst [vmem:[#allocation2 + $0x88] sm:$0xff] %v154
  %261 = vst [vmem:[#allocation2 + $0x90] sm:$0xff] %v225
  %262 = vst [vmem:[#allocation2 + $0x98] sm:$0xff] %v227
  %263 = vst [vmem:[#allocation2 + $0xa0] sm:$0xff] %v156
  %264 = vst [vmem:[#allocation2 + $0xa8] sm:$0xff] %v158
  %265 = vst [vmem:[#allocation2 + $0xb0] sm:$0xff] %v229
  %266 = vst [vmem:[#allocation2 + $0xb8] sm:$0xff] %v231
  %267 = vst [vmem:[#allocation2 + $0xc0] sm:$0xff] %v162
  %268 = vst [vmem:[#allocation2 + $0xc8] sm:$0xff] %v164
  %269 = vst [vmem:[#allocation2 + $0xd0] sm:$0xff] %v235
  %270 = vst [vmem:[#allocation2 + $0xd8] sm:$0xff] %v237
  %271 = vst [vmem:[#allocation2 + $0xe0] sm:$0xff] %v166
  %272 = vst [vmem:[#allocation2 + $0xe8] sm:$0xff] %v168
  %273 = vst [vmem:[#allocation2 + $0xf0] sm:$0xff] %v239
  %274 = vst [vmem:[#allocation2 + $0xf8] sm:$0xff] %v241
  %v275 = vld [vmem:[%s2] sm:$0xff]
  %v276 = vld [vmem:[%s2 + $0x8] sm:$0xff]
  %v277 = vld [vmem:[%s2 + $0x10] sm:$0xff]
  %v278 = vld [vmem:[%s2 + $0x18] sm:$0xff]
  %v279 = vld [vmem:[%s2 + $0x20] sm:$0xff]
  %v280 = vld [vmem:[%s2 + $0x28] sm:$0xff]
  %v281 = vld [vmem:[%s2 + $0x30] sm:$0xff]
  %v282 = vld [vmem:[%s2 + $0x38] sm:$0xff]
  %v283 = vld [vmem:[%s2 + $0x40] sm:$0xff]
  %v284 = vld [vmem:[%s2 + $0x48] sm:$0xff]
  %v285 = vld [vmem:[%s2 + $0x50] sm:$0xff]
  %v286 = vld [vmem:[%s2 + $0x58] sm:$0xff]
  %v287 = vld [vmem:[%s2 + $0x60] sm:$0xff]
  %v288 = vld [vmem:[%s2 + $0x68] sm:$0xff]
  %v289 = vld [vmem:[%s2 + $0x70] sm:$0xff]
  %v290 = vld [vmem:[%s2 + $0x78] sm:$0xff]
  %v291 = vld [vmem:[%s2 + $0x80] sm:$0xff]
  %v292 = vld [vmem:[%s2 + $0x88] sm:$0xff]
  %v293 = vld [vmem:[%s2 + $0x90] sm:$0xff]
  %v294 = vld [vmem:[%s2 + $0x98] sm:$0xff]
  %v295 = vld [vmem:[%s2 + $0xa0] sm:$0xff]
  %v296 = vld [vmem:[%s2 + $0xa8] sm:$0xff]
  %v297 = vld [vmem:[%s2 + $0xb0] sm:$0xff]
  %v298 = vld [vmem:[%s2 + $0xb8] sm:$0xff]
  %v299 = vld [vmem:[%s2 + $0xc0] sm:$0xff]
  %v300 = vld [vmem:[%s2 + $0xc8] sm:$0xff]
  %v301 = vld [vmem:[%s2 + $0xd0] sm:$0xff]
  %v302 = vld [vmem:[%s2 + $0xd8] sm:$0xff]
  %v303 = vld [vmem:[%s2 + $0xe0] sm:$0xff]
  %v304 = vld [vmem:[%s2 + $0xe8] sm:$0xff]
  %v305 = vld [vmem:[%s2 + $0xf0] sm:$0xff]
  %v306 = vld [vmem:[%s2 + $0xf8] sm:$0xff]
  %v307 = vld [vmem:[#allocation3] sm:$0xff]
  %v308 = vld [vmem:[#allocation4] sm:$0xff]
  %v309 = vpack.c.bf16 %v307, %v307
  %v310 = vld [vmem:[#allocation2] sm:$0xff]
  %v311 = vld [vmem:[#allocation2 + $0x8] sm:$0xff]
  %v312 = vld [vmem:[#allocation2 + $0x10] sm:$0xff]
  %v313 = vld [vmem:[#allocation2 + $0x18] sm:$0xff]
  %v346 = vunpack.c.l.b16 %v275
  %v347 = vunpack.c.h.b16 %v275
  %v348 = vunpack.c.l.b16 %v276
  %v349 = vunpack.c.h.b16 %v276
  %v350 = vunpack.c.l.b16 %v277
  %v351 = vunpack.c.h.b16 %v277
  %v352 = vunpack.c.l.b16 %v278
  %v353 = vunpack.c.h.b16 %v278
  %v354 = vunpack.c.l.b16 %v279
  %v355 = vunpack.c.h.b16 %v279
  %v356 = vunpack.c.l.b16 %v280
  %v357 = vunpack.c.h.b16 %v280
  %v358 = vunpack.c.l.b16 %v281
  %v359 = vunpack.c.h.b16 %v281
  %v360 = vunpack.c.l.b16 %v282
  %v361 = vunpack.c.h.b16 %v282
  %v362 = vunpack.c.l.b16 %v283
  %v363 = vunpack.c.h.b16 %v283
  %v364 = vunpack.c.l.b16 %v284
  %v365 = vunpack.c.h.b16 %v284
  %v366 = vunpack.c.l.b16 %v285
  %v367 = vunpack.c.h.b16 %v285
  %v368 = vunpack.c.l.b16 %v286
  %v369 = vunpack.c.h.b16 %v286
  %v370 = vunpack.c.l.b16 %v287
  %v371 = vunpack.c.h.b16 %v287
  %v372 = vunpack.c.l.b16 %v288
  %v373 = vunpack.c.h.b16 %v288
  %v374 = vunpack.c.l.b16 %v289
  %v375 = vunpack.c.h.b16 %v289
  %v376 = vunpack.c.l.b16 %v290
  %v377 = vunpack.c.h.b16 %v290
  %v378 = vunpack.c.l.b16 %v291
  %v379 = vunpack.c.h.b16 %v291
  %v380 = vunpack.c.l.b16 %v292
  %v381 = vunpack.c.h.b16 %v292
  %v382 = vunpack.c.l.b16 %v293
  %v383 = vunpack.c.h.b16 %v293
  %v384 = vunpack.c.l.b16 %v294
  %v385 = vunpack.c.h.b16 %v294
  %v386 = vunpack.c.l.b16 %v295
  %v387 = vunpack.c.h.b16 %v295
  %v388 = vunpack.c.l.b16 %v296
  %v389 = vunpack.c.h.b16 %v296
  %v390 = vunpack.c.l.b16 %v297
  %v391 = vunpack.c.h.b16 %v297
  %v392 = vunpack.c.l.b16 %v298
  %v393 = vunpack.c.h.b16 %v298
  %v394 = vunpack.c.l.b16 %v299
  %v395 = vunpack.c.h.b16 %v299
  %v396 = vunpack.c.l.b16 %v300
  %v397 = vunpack.c.h.b16 %v300
  %v398 = vunpack.c.l.b16 %v301
  %v399 = vunpack.c.h.b16 %v301
  %v400 = vunpack.c.l.b16 %v302
  %v401 = vunpack.c.h.b16 %v302
  %v402 = vunpack.c.l.b16 %v303
  %v403 = vunpack.c.h.b16 %v303
  %v404 = vunpack.c.l.b16 %v304
  %v405 = vunpack.c.h.b16 %v304
  %v406 = vunpack.c.l.b16 %v305
  %v407 = vunpack.c.h.b16 %v305
  %v408 = vunpack.c.l.b16 %v306
  %v409 = vunpack.c.h.b16 %v306
  %v410 = vpack.c.b16 %v350, %v346
  %v411 = vpack.c.b16 %v351, %v347
  %v412 = vpack.c.b16 %v352, %v348
  %v413 = vpack.c.b16 %v353, %v349
  %v414 = vpack.c.b16 %v358, %v354
  %v415 = vpack.c.b16 %v359, %v355
  %v416 = vpack.c.b16 %v360, %v356
  %v417 = vpack.c.b16 %v361, %v357
  %v418 = vpack.c.b16 %v366, %v362
  %v419 = vpack.c.b16 %v367, %v363
  %v420 = vpack.c.b16 %v368, %v364
  %v421 = vpack.c.b16 %v369, %v365
  %v422 = vpack.c.b16 %v374, %v370
  %v423 = vpack.c.b16 %v375, %v371
  %v424 = vpack.c.b16 %v376, %v372
  %v425 = vpack.c.b16 %v377, %v373
  %v426 = vpack.c.b16 %v382, %v378
  %v427 = vpack.c.b16 %v383, %v379
  %v428 = vpack.c.b16 %v384, %v380
  %v429 = vpack.c.b16 %v385, %v381
  %v430 = vpack.c.b16 %v390, %v386
  %v431 = vpack.c.b16 %v391, %v387
  %v432 = vpack.c.b16 %v392, %v388
  %v433 = vpack.c.b16 %v393, %v389
  %v434 = vpack.c.b16 %v398, %v394
  %v435 = vpack.c.b16 %v399, %v395
  %v436 = vpack.c.b16 %v400, %v396
  %v437 = vpack.c.b16 %v401, %v397
  %v438 = vpack.c.b16 %v406, %v402
  %v439 = vpack.c.b16 %v407, %v403
  %v440 = vpack.c.b16 %v408, %v404
  %v441 = vpack.c.b16 %v409, %v405
  %474 = vmatprep.subr.bf16.mxu0 %v411
  %475 = vmatpush1.bf16.msra.mxu0 %v410
  %476 = vmatprep.subr.bf16.mxu0 %v415
  %477 = vmatpush1.bf16.msra.mxu0 %v414
  %478 = vmatprep.subr.bf16.mxu0 %v419
  %479 = vmatpush1.bf16.msra.mxu0 %v418
  %480 = vmatprep.subr.bf16.mxu0 %v423
  %481 = vmatpush1.bf16.msra.mxu0 %v422
  %482 = vmatprep.subr.bf16.mxu0 %v427
  %483 = vmatpush1.bf16.msra.mxu0 %v426
  %484 = vmatprep.subr.bf16.mxu0 %v431
  %485 = vmatpush1.bf16.msra.mxu0 %v430
  %486 = vmatprep.subr.bf16.mxu0 %v435
  %487 = vmatpush1.bf16.msra.mxu0 %v434
  %488 = vmatprep.subr.bf16.mxu0 %v439
  %489 = vmatpush1.bf16.msra.mxu0 %v438
  %490 = vmatprep.subr.bf16.mxu0 0
  %491 = vmatpush1.bf16.msra.mxu0 0
  %492 = vmatprep.subr.bf16.mxu0 0
  %493 = vmatpush1.bf16.msra.mxu0 0
  %494 = vmatprep.subr.bf16.mxu0 0
  %495 = vmatpush1.bf16.msra.mxu0 0
  %496 = vmatprep.subr.bf16.mxu0 0
  %497 = vmatpush1.bf16.msra.mxu0 0
  %498 = vmatprep.subr.bf16.mxu0 0
  %499 = vmatpush1.bf16.msra.mxu0 0
  %500 = vmatprep.subr.bf16.mxu0 0
  %501 = vmatpush1.bf16.msra.mxu0 0
  %502 = vmatprep.subr.bf16.mxu0 0
  %503 = vmatpush1.bf16.msra.mxu0 0
  %504 = vmatprep.subr.bf16.mxu0 0
  %505 = vmatpush1.bf16.msra.mxu0 0
  %506 = vmatprep.mubr.bf16.mxu0 0
  %507 = vmatmul.mubr.bf16.gmra.mrb[0].mxu0 %v309
  %v508 = vpop.f32.mrb[0].mxu0
  %v509 = vadd.f32 %v310, %v508
  %v510 = vpop.f32.mrb[0].mxu0
  %v511 = vadd.f32 %v311, %v510
  %v512 = vpop.f32.mrb[0].mxu0
  %v513 = vpop.f32.mrb[0].mxu0
  %514 = vdwg.mxu0
  %515 = vmatprep.subr.bf16.mxu0 %v413
  %516 = vmatpush1.bf16.msra.mxu0 %v412
  %517 = vmatprep.subr.bf16.mxu0 %v417
  %518 = vmatpush1.bf16.msra.mxu0 %v416
  %519 = vmatprep.subr.bf16.mxu0 %v421
  %520 = vmatpush1.bf16.msra.mxu0 %v420
  %521 = vmatprep.subr.bf16.mxu0 %v425
  %522 = vmatpush1.bf16.msra.mxu0 %v424
  %523 = vmatprep.subr.bf16.mxu0 %v429
  %524 = vmatpush1.bf16.msra.mxu0 %v428
  %525 = vmatprep.subr.bf16.mxu0 %v433
  %526 = vmatpush1.bf16.msra.mxu0 %v432
  %527 = vmatprep.subr.bf16.mxu0 %v437
  %528 = vmatpush1.bf16.msra.mxu0 %v436
  %529 = vmatprep.subr.bf16.mxu0 %v441
  %530 = vmatpush1.bf16.msra.mxu0 %v440
  %531 = vmatprep.subr.bf16.mxu0 0
  %532 = vmatpush1.bf16.msra.mxu0 0
  %533 = vmatprep.subr.bf16.mxu0 0
  %534 = vmatpush1.bf16.msra.mxu0 0
  %535 = vmatprep.subr.bf16.mxu0 0
  %536 = vmatpush1.bf16.msra.mxu0 0
  %537 = vmatprep.subr.bf16.mxu0 0
  %538 = vmatpush1.bf16.msra.mxu0 0
  %539 = vmatprep.subr.bf16.mxu0 0
  %540 = vmatpush1.bf16.msra.mxu0 0
  %541 = vmatprep.subr.bf16.mxu0 0
  %542 = vmatpush1.bf16.msra.mxu0 0
  %543 = vmatprep.subr.bf16.mxu0 0
  %544 = vmatpush1.bf16.msra.mxu0 0
  %545 = vmatprep.subr.bf16.mxu0 0
  %546 = vmatpush1.bf16.msra.mxu0 0
  %547 = vmatprep.mubr.bf16.mxu0 0
  %548 = vmatmul.mubr.bf16.gmra.mrb[0].mxu0 %v309
  %v549 = vpop.f32.mrb[0].mxu0
  %v550 = vadd.f32 %v312, %v549
  %v551 = vpop.f32.mrb[0].mxu0
  %v552 = vadd.f32 %v313, %v551
  %v553 = vpop.f32.mrb[0].mxu0
  %v554 = vpop.f32.mrb[0].mxu0
  %555 = vdwg.mxu0
  %v556 = vmul.f32 %v509, 0.5
  %v557 = vtanh.pop %v556
  %v558 = vmul.f32 %v557, 0.5
  %v559 = vadd.f32 %v558, 0.5
  %v560 = vmul.f32 %v511, 0.5
  %v561 = vtanh.pop %v560
  %v562 = vmul.f32 %v561, 0.5
  %v563 = vadd.f32 %v562, 0.5
  %v564 = vtanh.pop %v550
  %v565 = vmul.f32 %v552, 0.5
  %v566 = vtanh.pop %v565
  %v567 = vmul.f32 %v566, 0.5
  %v568 = vadd.f32 %v567, 0.5
  %v569 = vmul.f32 %v563, %v308
  %v570 = vmul.f32 %v559, %v564
  %v571 = vadd.f32 %v569, %v570
  %v572 = vtanh.pop %v571
  %v573 = vmul.f32 %v568, %v572
  %v574 = vpack.c.bf16 %v573, %v573
  %s575 = scalar_lea.vmem [#allocation2], 32
  %v576 = vld [vmem:[%s575] sm:$0xff]
  %v577 = vld [vmem:[%s575 + $0x8] sm:$0xff]
  %v578 = vld [vmem:[%s575 + $0x10] sm:$0xff]
  %v579 = vld [vmem:[%s575 + $0x18] sm:$0xff]
  %580 = vmatprep.subr.bf16.mxu0 %v411
  %581 = vmatpush1.bf16.msra.mxu0 %v410
  %582 = vmatprep.subr.bf16.mxu0 %v415
  %583 = vmatpush1.bf16.msra.mxu0 %v414
  %584 = vmatprep.subr.bf16.mxu0 %v419
  %585 = vmatpush1.bf16.msra.mxu0 %v418
  %586 = vmatprep.subr.bf16.mxu0 %v423
  %587 = vmatpush1.bf16.msra.mxu0 %v422
  %588 = vmatprep.subr.bf16.mxu0 %v427
  %589 = vmatpush1.bf16.msra.mxu0 %v426
  %590 = vmatprep.subr.bf16.mxu0 %v431
  %591 = vmatpush1.bf16.msra.mxu0 %v430
  %592 = vmatprep.subr.bf16.mxu0 %v435
  %593 = vmatpush1.bf16.msra.mxu0 %v434
  %594 = vmatprep.subr.bf16.mxu0 %v439
  %595 = vmatpush1.bf16.msra.mxu0 %v438
  %596 = vmatprep.subr.bf16.mxu0 0
  %597 = vmatpush1.bf16.msra.mxu0 0
  %598 = vmatprep.subr.bf16.mxu0 0
  %599 = vmatpush1.bf16.msra.mxu0 0
  %600 = vmatprep.subr.bf16.mxu0 0
  %601 = vmatpush1.bf16.msra.mxu0 0
  %602 = vmatprep.subr.bf16.mxu0 0
  %603 = vmatpush1.bf16.msra.mxu0 0
  %604 = vmatprep.subr.bf16.mxu0 0
  %605 = vmatpush1.bf16.msra.mxu0 0
  %606 = vmatprep.subr.bf16.mxu0 0
  %607 = vmatpush1.bf16.msra.mxu0 0
  %608 = vmatprep.subr.bf16.mxu0 0
  %609 = vmatpush1.bf16.msra.mxu0 0
  %610 = vmatprep.subr.bf16.mxu0 0
  %611 = vmatpush1.bf16.msra.mxu0 0
  %612 = vmatprep.mubr.bf16.mxu0 0
  %613 = vmatmul.mubr.bf16.gmra.mrb[0].mxu0 %v574
  %v614 = vpop.f32.mrb[0].mxu0
  %v615 = vadd.f32 %v576, %v614
  %v616 = vpop.f32.mrb[0].mxu0
  %v617 = vadd.f32 %v577, %v616
  %v618 = vpop.f32.mrb[0].mxu0
  %v619 = vpop.f32.mrb[0].mxu0
  %620 = vdwg.mxu0
  %621 = vmatprep.subr.bf16.mxu0 %v413
  %622 = vmatpush1.bf16.msra.mxu0 %v412
  %623 = vmatprep.subr.bf16.mxu0 %v417
  %624 = vmatpush1.bf16.msra.mxu0 %v416
  %625 = vmatprep.subr.bf16.mxu0 %v421
  %626 = vmatpush1.bf16.msra.mxu0 %v420
  %627 = vmatprep.subr.bf16.mxu0 %v425
  %628 = vmatpush1.bf16.msra.mxu0 %v424
  %629 = vmatprep.subr.bf16.mxu0 %v429
  %630 = vmatpush1.bf16.msra.mxu0 %v428
  %631 = vmatprep.subr.bf16.mxu0 %v433
  %632 = vmatpush1.bf16.msra.mxu0 %v432
  %633 = vmatprep.subr.bf16.mxu0 %v437
  %634 = vmatpush1.bf16.msra.mxu0 %v436
  %635 = vmatprep.subr.bf16.mxu0 %v441
  %636 = vmatpush1.bf16.msra.mxu0 %v440
  %637 = vmatprep.subr.bf16.mxu0 0
  %638 = vmatpush1.bf16.msra.mxu0 0
  %639 = vmatprep.subr.bf16.mxu0 0
  %640 = vmatpush1.bf16.msra.mxu0 0
  %641 = vmatprep.subr.bf16.mxu0 0
  %642 = vmatpush1.bf16.msra.mxu0 0
  %643 = vmatprep.subr.bf16.mxu0 0
  %644 = vmatpush1.bf16.msra.mxu0 0
  %645 = vmatprep.subr.bf16.mxu0 0
  %646 = vmatpush1.bf16.msra.mxu0 0
  %647 = vmatprep.subr.bf16.mxu0 0
  %648 = vmatpush1.bf16.msra.mxu0 0
  %649 = vmatprep.subr.bf16.mxu0 0
  %650 = vmatpush1.bf16.msra.mxu0 0
  %651 = vmatprep.subr.bf16.mxu0 0
  %652 = vmatpush1.bf16.msra.mxu0 0
  %653 = vmatprep.mubr.bf16.mxu0 0
  %654 = vmatmul.mubr.bf16.gmra.mrb[0].mxu0 %v574
  %v655 = vpop.f32.mrb[0].mxu0
  %v656 = vadd.f32 %v578, %v655
  %v657 = vpop.f32.mrb[0].mxu0
  %v658 = vadd.f32 %v579, %v657
  %v659 = vpop.f32.mrb[0].mxu0
  %v660 = vpop.f32.mrb[0].mxu0
  %661 = vdwg.mxu0
  %v662 = vmul.f32 %v615, 0.5
  %v663 = vtanh.pop %v662
  %v664 = vmul.f32 %v663, 0.5
  %v665 = vadd.f32 %v664, 0.5
  %v666 = vmul.f32 %v617, 0.5
  %v667 = vtanh.pop %v666
  %v668 = vmul.f32 %v667, 0.5
  %v669 = vadd.f32 %v668, 0.5
  %v670 = vtanh.pop %v656
  %v671 = vmul.f32 %v658, 0.5
  %v672 = vtanh.pop %v671
  %v673 = vmul.f32 %v672, 0.5
  %v674 = vadd.f32 %v673, 0.5
  %v675 = vmul.f32 %v669, %v571
  %v676 = vmul.f32 %v665, %v670
  %v677 = vadd.f32 %v675, %v676
  %v678 = vtanh.pop %v677
  %v679 = vmul.f32 %v674, %v678
  %v680 = vpack.c.bf16 %v679, %v679
  %s681 = scalar_lea.vmem [#allocation2], 64
  %v682 = vld [vmem:[%s681] sm:$0xff]
  %v683 = vld [vmem:[%s681 + $0x8] sm:$0xff]
  %v684 = vld [vmem:[%s681 + $0x10] sm:$0xff]
  %v685 = vld [vmem:[%s681 + $0x18] sm:$0xff]
  %686 = vmatprep.subr.bf16.mxu0 %v411
  %687 = vmatpush1.bf16.msra.mxu0 %v410
  %688 = vmatprep.subr.bf16.mxu0 %v415
  %689 = vmatpush1.bf16.msra.mxu0 %v414
  %690 = vmatprep.subr.bf16.mxu0 %v419
  %691 = vmatpush1.bf16.msra.mxu0 %v418
  %692 = vmatprep.subr.bf16.mxu0 %v423
  %693 = vmatpush1.bf16.msra.mxu0 %v422
  %694 = vmatprep.subr.bf16.mxu0 %v427
  %695 = vmatpush1.bf16.msra.mxu0 %v426
  %696 = vmatprep.subr.bf16.mxu0 %v431
  %697 = vmatpush1.bf16.msra.mxu0 %v430
  %698 = vmatprep.subr.bf16.mxu0 %v435
  %699 = vmatpush1.bf16.msra.mxu0 %v434
  %700 = vmatprep.subr.bf16.mxu0 %v439
  %701 = vmatpush1.bf16.msra.mxu0 %v438
  %702 = vmatprep.subr.bf16.mxu0 0
  %703 = vmatpush1.bf16.msra.mxu0 0
  %704 = vmatprep.subr.bf16.mxu0 0
  %705 = vmatpush1.bf16.msra.mxu0 0
  %706 = vmatprep.subr.bf16.mxu0 0
  %707 = vmatpush1.bf16.msra.mxu0 0
  %708 = vmatprep.subr.bf16.mxu0 0
  %709 = vmatpush1.bf16.msra.mxu0 0
  %710 = vmatprep.subr.bf16.mxu0 0
  %711 = vmatpush1.bf16.msra.mxu0 0
  %712 = vmatprep.subr.bf16.mxu0 0
  %713 = vmatpush1.bf16.msra.mxu0 0
  %714 = vmatprep.subr.bf16.mxu0 0
  %715 = vmatpush1.bf16.msra.mxu0 0
  %716 = vmatprep.subr.bf16.mxu0 0
  %717 = vmatpush1.bf16.msra.mxu0 0
  %718 = vmatprep.mubr.bf16.mxu0 0
  %719 = vmatmul.mubr.bf16.gmra.mrb[0].mxu0 %v680
  %v720 = vpop.f32.mrb[0].mxu0
  %v721 = vadd.f32 %v682, %v720
  %v722 = vpop.f32.mrb[0].mxu0
  %v723 = vadd.f32 %v683, %v722
  %v724 = vpop.f32.mrb[0].mxu0
  %v725 = vpop.f32.mrb[0].mxu0
  %726 = vdwg.mxu0
  %727 = vmatprep.subr.bf16.mxu0 %v413
  %728 = vmatpush1.bf16.msra.mxu0 %v412
  %729 = vmatprep.subr.bf16.mxu0 %v417
  %730 = vmatpush1.bf16.msra.mxu0 %v416
  %731 = vmatprep.subr.bf16.mxu0 %v421
  %732 = vmatpush1.bf16.msra.mxu0 %v420
  %733 = vmatprep.subr.bf16.mxu0 %v425
  %734 = vmatpush1.bf16.msra.mxu0 %v424
  %735 = vmatprep.subr.bf16.mxu0 %v429
  %736 = vmatpush1.bf16.msra.mxu0 %v428
  %737 = vmatprep.subr.bf16.mxu0 %v433
  %738 = vmatpush1.bf16.msra.mxu0 %v432
  %739 = vmatprep.subr.bf16.mxu0 %v437
  %740 = vmatpush1.bf16.msra.mxu0 %v436
  %741 = vmatprep.subr.bf16.mxu0 %v441
  %742 = vmatpush1.bf16.msra.mxu0 %v440
  %743 = vmatprep.subr.bf16.mxu0 0
  %744 = vmatpush1.bf16.msra.mxu0 0
  %745 = vmatprep.subr.bf16.mxu0 0
  %746 = vmatpush1.bf16.msra.mxu0 0
  %747 = vmatprep.subr.bf16.mxu0 0
  %748 = vmatpush1.bf16.msra.mxu0 0
  %749 = vmatprep.subr.bf16.mxu0 0
  %750 = vmatpush1.bf16.msra.mxu0 0
  %751 = vmatprep.subr.bf16.mxu0 0
  %752 = vmatpush1.bf16.msra.mxu0 0
  %753 = vmatprep.subr.bf16.mxu0 0
  %754 = vmatpush1.bf16.msra.mxu0 0
  %755 = vmatprep.subr.bf16.mxu0 0
  %756 = vmatpush1.bf16.msra.mxu0 0
  %757 = vmatprep.subr.bf16.mxu0 0
  %758 = vmatpush1.bf16.msra.mxu0 0
  %759 = vmatprep.mubr.bf16.mxu0 0
  %760 = vmatmul.mubr.bf16.gmra.mrb[0].mxu0 %v680
  %v761 = vpop.f32.mrb[0].mxu0
  %v762 = vadd.f32 %v684, %v761
  %v763 = vpop.f32.mrb[0].mxu0
  %v764 = vadd.f32 %v685, %v763
  %v765 = vpop.f32.mrb[0].mxu0
  %v766 = vpop.f32.mrb[0].mxu0
  %767 = vdwg.mxu0
  %v768 = vmul.f32 %v721, 0.5
  %v769 = vtanh.pop %v768
  %v770 = vmul.f32 %v769, 0.5
  %v771 = vadd.f32 %v770, 0.5
  %v772 = vmul.f32 %v723, 0.5
  %v773 = vtanh.pop %v772
  %v774 = vmul.f32 %v773, 0.5
  %v775 = vadd.f32 %v774, 0.5
  %v776 = vtanh.pop %v762
  %v777 = vmul.f32 %v764, 0.5
  %v778 = vtanh.pop %v777
  %v779 = vmul.f32 %v778, 0.5
  %v780 = vadd.f32 %v779, 0.5
  %v781 = vmul.f32 %v775, %v677
  %v782 = vmul.f32 %v771, %v776
  %v783 = vadd.f32 %v781, %v782
  %v784 = vtanh.pop %v783
  %v785 = vmul.f32 %v780, %v784
  %v786 = vpack.c.bf16 %v785, %v785
  %s787 = scalar_lea.vmem [#allocation2], 96
  %v788 = vld [vmem:[%s787] sm:$0xff]
  %v789 = vld [vmem:[%s787 + $0x8] sm:$0xff]
  %v790 = vld [vmem:[%s787 + $0x10] sm:$0xff]
  %v791 = vld [vmem:[%s787 + $0x18] sm:$0xff]
  %792 = vmatprep.subr.bf16.mxu0 %v411
  %793 = vmatpush1.bf16.msra.mxu0 %v410
  %794 = vmatprep.subr.bf16.mxu0 %v415
  %795 = vmatpush1.bf16.msra.mxu0 %v414
  %796 = vmatprep.subr.bf16.mxu0 %v419
  %797 = vmatpush1.bf16.msra.mxu0 %v418
  %798 = vmatprep.subr.bf16.mxu0 %v423
  %799 = vmatpush1.bf16.msra.mxu0 %v422
  %800 = vmatprep.subr.bf16.mxu0 %v427
  %801 = vmatpush1.bf16.msra.mxu0 %v426
  %802 = vmatprep.subr.bf16.mxu0 %v431
  %803 = vmatpush1.bf16.msra.mxu0 %v430
  %804 = vmatprep.subr.bf16.mxu0 %v435
  %805 = vmatpush1.bf16.msra.mxu0 %v434
  %806 = vmatprep.subr.bf16.mxu0 %v439
  %807 = vmatpush1.bf16.msra.mxu0 %v438
  %808 = vmatprep.subr.bf16.mxu0 0
  %809 = vmatpush1.bf16.msra.mxu0 0
  %810 = vmatprep.subr.bf16.mxu0 0
  %811 = vmatpush1.bf16.msra.mxu0 0
  %812 = vmatprep.subr.bf16.mxu0 0
  %813 = vmatpush1.bf16.msra.mxu0 0
  %814 = vmatprep.subr.bf16.mxu0 0
  %815 = vmatpush1.bf16.msra.mxu0 0
  %816 = vmatprep.subr.bf16.mxu0 0
  %817 = vmatpush1.bf16.msra.mxu0 0
  %818 = vmatprep.subr.bf16.mxu0 0
  %819 = vmatpush1.bf16.msra.mxu0 0
  %820 = vmatprep.subr.bf16.mxu0 0
  %821 = vmatpush1.bf16.msra.mxu0 0
  %822 = vmatprep.subr.bf16.mxu0 0
  %823 = vmatpush1.bf16.msra.mxu0 0
  %824 = vmatprep.mubr.bf16.mxu0 0
  %825 = vmatmul.mubr.bf16.gmra.mrb[0].mxu0 %v786
  %v826 = vpop.f32.mrb[0].mxu0
  %v827 = vadd.f32 %v788, %v826
  %v828 = vpop.f32.mrb[0].mxu0
  %v829 = vadd.f32 %v789, %v828
  %v830 = vpop.f32.mrb[0].mxu0
  %v831 = vpop.f32.mrb[0].mxu0
  %832 = vdwg.mxu0
  %833 = vmatprep.subr.bf16.mxu0 %v413
  %834 = vmatpush1.bf16.msra.mxu0 %v412
  %835 = vmatprep.subr.bf16.mxu0 %v417
  %836 = vmatpush1.bf16.msra.mxu0 %v416
  %837 = vmatprep.subr.bf16.mxu0 %v421
  %838 = vmatpush1.bf16.msra.mxu0 %v420
  %839 = vmatprep.subr.bf16.mxu0 %v425
  %840 = vmatpush1.bf16.msra.mxu0 %v424
  %841 = vmatprep.subr.bf16.mxu0 %v429
  %842 = vmatpush1.bf16.msra.mxu0 %v428
  %843 = vmatprep.subr.bf16.mxu0 %v433
  %844 = vmatpush1.bf16.msra.mxu0 %v432
  %845 = vmatprep.subr.bf16.mxu0 %v437
  %846 = vmatpush1.bf16.msra.mxu0 %v436
  %847 = vmatprep.subr.bf16.mxu0 %v441
  %848 = vmatpush1.bf16.msra.mxu0 %v440
  %849 = vmatprep.subr.bf16.mxu0 0
  %850 = vmatpush1.bf16.msra.mxu0 0
  %851 = vmatprep.subr.bf16.mxu0 0
  %852 = vmatpush1.bf16.msra.mxu0 0
  %853 = vmatprep.subr.bf16.mxu0 0
  %854 = vmatpush1.bf16.msra.mxu0 0
  %855 = vmatprep.subr.bf16.mxu0 0
  %856 = vmatpush1.bf16.msra.mxu0 0
  %857 = vmatprep.subr.bf16.mxu0 0
  %858 = vmatpush1.bf16.msra.mxu0 0
  %859 = vmatprep.subr.bf16.mxu0 0
  %860 = vmatpush1.bf16.msra.mxu0 0
  %861 = vmatprep.subr.bf16.mxu0 0
  %862 = vmatpush1.bf16.msra.mxu0 0
  %863 = vmatprep.subr.bf16.mxu0 0
  %864 = vmatpush1.bf16.msra.mxu0 0
  %865 = vmatprep.mubr.bf16.mxu0 0
  %866 = vmatmul.mubr.bf16.gmra.mrb[0].mxu0 %v786
  %v867 = vpop.f32.mrb[0].mxu0
  %v868 = vadd.f32 %v790, %v867
  %v869 = vpop.f32.mrb[0].mxu0
  %v870 = vadd.f32 %v791, %v869
  %v871 = vpop.f32.mrb[0].mxu0
  %v872 = vpop.f32.mrb[0].mxu0
  %873 = vdwg.mxu0
  %v874 = vmul.f32 %v827, 0.5
  %v875 = vtanh.pop %v874
  %v876 = vmul.f32 %v875, 0.5
  %v877 = vadd.f32 %v876, 0.5
  %v878 = vmul.f32 %v829, 0.5
  %v879 = vtanh.pop %v878
  %v880 = vmul.f32 %v879, 0.5
  %v881 = vadd.f32 %v880, 0.5
  %v882 = vtanh.pop %v868
  %v883 = vmul.f32 %v870, 0.5
  %v884 = vtanh.pop %v883
  %v885 = vmul.f32 %v884, 0.5
  %v886 = vadd.f32 %v885, 0.5
  %v887 = vmul.f32 %v881, %v783
  %v888 = vmul.f32 %v877, %v882
  %v889 = vadd.f32 %v887, %v888
  %v890 = vtanh.pop %v889
  %v891 = vmul.f32 %v886, %v890
  %v892 = vpack.c.bf16 %v891, %v891
  %s893 = scalar_lea.vmem [#allocation2], 128
  %v894 = vld [vmem:[%s893] sm:$0xff]
  %v895 = vld [vmem:[%s893 + $0x8] sm:$0xff]
  %v896 = vld [vmem:[%s893 + $0x10] sm:$0xff]
  %v897 = vld [vmem:[%s893 + $0x18] sm:$0xff]
  %898 = vmatprep.subr.bf16.mxu0 %v411
  %899 = vmatpush1.bf16.msra.mxu0 %v410
  %900 = vmatprep.subr.bf16.mxu0 %v415
  %901 = vmatpush1.bf16.msra.mxu0 %v414
  %902 = vmatprep.subr.bf16.mxu0 %v419
  %903 = vmatpush1.bf16.msra.mxu0 %v418
  %904 = vmatprep.subr.bf16.mxu0 %v423
  %905 = vmatpush1.bf16.msra.mxu0 %v422
  %906 = vmatprep.subr.bf16.mxu0 %v427
  %907 = vmatpush1.bf16.msra.mxu0 %v426
  %908 = vmatprep.subr.bf16.mxu0 %v431
  %909 = vmatpush1.bf16.msra.mxu0 %v430
  %910 = vmatprep.subr.bf16.mxu0 %v435
  %911 = vmatpush1.bf16.msra.mxu0 %v434
  %912 = vmatprep.subr.bf16.mxu0 %v439
  %913 = vmatpush1.bf16.msra.mxu0 %v438
  %914 = vmatprep.subr.bf16.mxu0 0
  %915 = vmatpush1.bf16.msra.mxu0 0
  %916 = vmatprep.subr.bf16.mxu0 0
  %917 = vmatpush1.bf16.msra.mxu0 0
  %918 = vmatprep.subr.bf16.mxu0 0
  %919 = vmatpush1.bf16.msra.mxu0 0
  %920 = vmatprep.subr.bf16.mxu0 0
  %921 = vmatpush1.bf16.msra.mxu0 0
  %922 = vmatprep.subr.bf16.mxu0 0
  %923 = vmatpush1.bf16.msra.mxu0 0
  %924 = vmatprep.subr.bf16.mxu0 0
  %925 = vmatpush1.bf16.msra.mxu0 0
  %926 = vmatprep.subr.bf16.mxu0 0
  %927 = vmatpush1.bf16.msra.mxu0 0
  %928 = vmatprep.subr.bf16.mxu0 0
  %929 = vmatpush1.bf16.msra.mxu0 0
  %930 = vmatprep.mubr.bf16.mxu0 0
  %931 = vmatmul.mubr.bf16.gmra.mrb[0].mxu0 %v892
  %v932 = vpop.f32.mrb[0].mxu0
  %v933 = vadd.f32 %v894, %v932
  %v934 = vpop.f32.mrb[0].mxu0
  %v935 = vadd.f32 %v895, %v934
  %v936 = vpop.f32.mrb[0].mxu0
  %v937 = vpop.f32.mrb[0].mxu0
  %938 = vdwg.mxu0
  %939 = vmatprep.subr.bf16.mxu0 %v413
  %940 = vmatpush1.bf16.msra.mxu0 %v412
  %941 = vmatprep.subr.bf16.mxu0 %v417
  %942 = vmatpush1.bf16.msra.mxu0 %v416
  %943 = vmatprep.subr.bf16.mxu0 %v421
  %944 = vmatpush1.bf16.msra.mxu0 %v420
  %945 = vmatprep.subr.bf16.mxu0 %v425
  %946 = vmatpush1.bf16.msra.mxu0 %v424
  %947 = vmatprep.subr.bf16.mxu0 %v429
  %948 = vmatpush1.bf16.msra.mxu0 %v428
  %949 = vmatprep.subr.bf16.mxu0 %v433
  %950 = vmatpush1.bf16.msra.mxu0 %v432
  %951 = vmatprep.subr.bf16.mxu0 %v437
  %952 = vmatpush1.bf16.msra.mxu0 %v436
  %953 = vmatprep.subr.bf16.mxu0 %v441
  %954 = vmatpush1.bf16.msra.mxu0 %v440
  %955 = vmatprep.subr.bf16.mxu0 0
  %956 = vmatpush1.bf16.msra.mxu0 0
  %957 = vmatprep.subr.bf16.mxu0 0
  %958 = vmatpush1.bf16.msra.mxu0 0
  %959 = vmatprep.subr.bf16.mxu0 0
  %960 = vmatpush1.bf16.msra.mxu0 0
  %961 = vmatprep.subr.bf16.mxu0 0
  %962 = vmatpush1.bf16.msra.mxu0 0
  %963 = vmatprep.subr.bf16.mxu0 0
  %964 = vmatpush1.bf16.msra.mxu0 0
  %965 = vmatprep.subr.bf16.mxu0 0
  %966 = vmatpush1.bf16.msra.mxu0 0
  %967 = vmatprep.subr.bf16.mxu0 0
  %968 = vmatpush1.bf16.msra.mxu0 0
  %969 = vmatprep.subr.bf16.mxu0 0
  %970 = vmatpush1.bf16.msra.mxu0 0
  %971 = vmatprep.mubr.bf16.mxu0 0
  %972 = vmatmul.mubr.bf16.gmra.mrb[0].mxu0 %v892
  %v973 = vpop.f32.mrb[0].mxu0
  %v974 = vadd.f32 %v896, %v973
  %v975 = vpop.f32.mrb[0].mxu0
  %v976 = vadd.f32 %v897, %v975
  %v977 = vpop.f32.mrb[0].mxu0
  %v978 = vpop.f32.mrb[0].mxu0
  %979 = vdwg.mxu0
  %v980 = vmul.f32 %v933, 0.5
  %v981 = vtanh.pop %v980
  %v982 = vmul.f32 %v981, 0.5
  %v983 = vadd.f32 %v982, 0.5
  %v984 = vmul.f32 %v935, 0.5
  %v985 = vtanh.pop %v984
  %v986 = vmul.f32 %v985, 0.5
  %v987 = vadd.f32 %v986, 0.5
  %v988 = vtanh.pop %v974
  %v989 = vmul.f32 %v976, 0.5
  %v990 = vtanh.pop %v989
  %v991 = vmul.f32 %v990, 0.5
  %v992 = vadd.f32 %v991, 0.5
  %v993 = vmul.f32 %v987, %v889
  %v994 = vmul.f32 %v983, %v988
  %v995 = vadd.f32 %v993, %v994
  %v996 = vtanh.pop %v995
  %v997 = vmul.f32 %v992, %v996
  %v998 = vpack.c.bf16 %v997, %v997
  %s999 = scalar_lea.vmem [#allocation2], 160
  %v1000 = vld [vmem:[%s999] sm:$0xff]
  %v1001 = vld [vmem:[%s999 + $0x8] sm:$0xff]
  %v1002 = vld [vmem:[%s999 + $0x10] sm:$0xff]
  %v1003 = vld [vmem:[%s999 + $0x18] sm:$0xff]
  %1004 = vmatprep.subr.bf16.mxu0 %v411
  %1005 = vmatpush1.bf16.msra.mxu0 %v410
  %1006 = vmatprep.subr.bf16.mxu0 %v415
  %1007 = vmatpush1.bf16.msra.mxu0 %v414
  %1008 = vmatprep.subr.bf16.mxu0 %v419
  %1009 = vmatpush1.bf16.msra.mxu0 %v418
  %1010 = vmatprep.subr.bf16.mxu0 %v423
  %1011 = vmatpush1.bf16.msra.mxu0 %v422
  %1012 = vmatprep.subr.bf16.mxu0 %v427
  %1013 = vmatpush1.bf16.msra.mxu0 %v426
  %1014 = vmatprep.subr.bf16.mxu0 %v431
  %1015 = vmatpush1.bf16.msra.mxu0 %v430
  %1016 = vmatprep.subr.bf16.mxu0 %v435
  %1017 = vmatpush1.bf16.msra.mxu0 %v434
  %1018 = vmatprep.subr.bf16.mxu0 %v439
  %1019 = vmatpush1.bf16.msra.mxu0 %v438
  %1020 = vmatprep.subr.bf16.mxu0 0
  %1021 = vmatpush1.bf16.msra.mxu0 0
  %1022 = vmatprep.subr.bf16.mxu0 0
  %1023 = vmatpush1.bf16.msra.mxu0 0
  %1024 = vmatprep.subr.bf16.mxu0 0
  %1025 = vmatpush1.bf16.msra.mxu0 0
  %1026 = vmatprep.subr.bf16.mxu0 0
  %1027 = vmatpush1.bf16.msra.mxu0 0
  %1028 = vmatprep.subr.bf16.mxu0 0
  %1029 = vmatpush1.bf16.msra.mxu0 0
  %1030 = vmatprep.subr.bf16.mxu0 0
  %1031 = vmatpush1.bf16.msra.mxu0 0
  %1032 = vmatprep.subr.bf16.mxu0 0
  %1033 = vmatpush1.bf16.msra.mxu0 0
  %1034 = vmatprep.subr.bf16.mxu0 0
  %1035 = vmatpush1.bf16.msra.mxu0 0
  %1036 = vmatprep.mubr.bf16.mxu0 0
  %1037 = vmatmul.mubr.bf16.gmra.mrb[0].mxu0 %v998
  %v1038 = vpop.f32.mrb[0].mxu0
  %v1039 = vadd.f32 %v1000, %v1038
  %v1040 = vpop.f32.mrb[0].mxu0
  %v1041 = vadd.f32 %v1001, %v1040
  %v1042 = vpop.f32.mrb[0].mxu0
  %v1043 = vpop.f32.mrb[0].mxu0
  %1044 = vdwg.mxu0
  %1045 = vmatprep.subr.bf16.mxu0 %v413
  %1046 = vmatpush1.bf16.msra.mxu0 %v412
  %1047 = vmatprep.subr.bf16.mxu0 %v417
  %1048 = vmatpush1.bf16.msra.mxu0 %v416
  %1049 = vmatprep.subr.bf16.mxu0 %v421
  %1050 = vmatpush1.bf16.msra.mxu0 %v420
  %1051 = vmatprep.subr.bf16.mxu0 %v425
  %1052 = vmatpush1.bf16.msra.mxu0 %v424
  %1053 = vmatprep.subr.bf16.mxu0 %v429
  %1054 = vmatpush1.bf16.msra.mxu0 %v428
  %1055 = vmatprep.subr.bf16.mxu0 %v433
  %1056 = vmatpush1.bf16.msra.mxu0 %v432
  %1057 = vmatprep.subr.bf16.mxu0 %v437
  %1058 = vmatpush1.bf16.msra.mxu0 %v436
  %1059 = vmatprep.subr.bf16.mxu0 %v441
  %1060 = vmatpush1.bf16.msra.mxu0 %v440
  %1061 = vmatprep.subr.bf16.mxu0 0
  %1062 = vmatpush1.bf16.msra.mxu0 0
  %1063 = vmatprep.subr.bf16.mxu0 0
  %1064 = vmatpush1.bf16.msra.mxu0 0
  %1065 = vmatprep.subr.bf16.mxu0 0
  %1066 = vmatpush1.bf16.msra.mxu0 0
  %1067 = vmatprep.subr.bf16.mxu0 0
  %1068 = vmatpush1.bf16.msra.mxu0 0
  %1069 = vmatprep.subr.bf16.mxu0 0
  %1070 = vmatpush1.bf16.msra.mxu0 0
  %1071 = vmatprep.subr.bf16.mxu0 0
  %1072 = vmatpush1.bf16.msra.mxu0 0
  %1073 = vmatprep.subr.bf16.mxu0 0
  %1074 = vmatpush1.bf16.msra.mxu0 0
  %1075 = vmatprep.subr.bf16.mxu0 0
  %1076 = vmatpush1.bf16.msra.mxu0 0
  %1077 = vmatprep.mubr.bf16.mxu0 0
  %1078 = vmatmul.mubr.bf16.gmra.mrb[0].mxu0 %v998
  %v1079 = vpop.f32.mrb[0].mxu0
  %v1080 = vadd.f32 %v1002, %v1079
  %v1081 = vpop.f32.mrb[0].mxu0
  %v1082 = vadd.f32 %v1003, %v1081
  %v1083 = vpop.f32.mrb[0].mxu0
  %v1084 = vpop.f32.mrb[0].mxu0
  %1085 = vdwg.mxu0
  %v1086 = vmul.f32 %v1039, 0.5
  %v1087 = vtanh.pop %v1086
  %v1088 = vmul.f32 %v1087, 0.5
  %v1089 = vadd.f32 %v1088, 0.5
  %v1090 = vmul.f32 %v1041, 0.5
  %v1091 = vtanh.pop %v1090
  %v1092 = vmul.f32 %v1091, 0.5
  %v1093 = vadd.f32 %v1092, 0.5
  %v1094 = vtanh.pop %v1080
  %v1095 = vmul.f32 %v1082, 0.5
  %v1096 = vtanh.pop %v1095
  %v1097 = vmul.f32 %v1096, 0.5
  %v1098 = vadd.f32 %v1097, 0.5
  %v1099 = vmul.f32 %v1093, %v995
  %v1100 = vmul.f32 %v1089, %v1094
  %v1101 = vadd.f32 %v1099, %v1100
  %v1102 = vtanh.pop %v1101
  %v1103 = vmul.f32 %v1098, %v1102
  %v1104 = vpack.c.bf16 %v1103, %v1103
  %s1105 = scalar_lea.vmem [#allocation2], 192
  %v1106 = vld [vmem:[%s1105] sm:$0xff]
  %v1107 = vld [vmem:[%s1105 + $0x8] sm:$0xff]
  %v1108 = vld [vmem:[%s1105 + $0x10] sm:$0xff]
  %v1109 = vld [vmem:[%s1105 + $0x18] sm:$0xff]
  %1110 = vmatprep.subr.bf16.mxu0 %v411
  %1111 = vmatpush1.bf16.msra.mxu0 %v410
  %1112 = vmatprep.subr.bf16.mxu0 %v415
  %1113 = vmatpush1.bf16.msra.mxu0 %v414
  %1114 = vmatprep.subr.bf16.mxu0 %v419
  %1115 = vmatpush1.bf16.msra.mxu0 %v418
  %1116 = vmatprep.subr.bf16.mxu0 %v423
  %1117 = vmatpush1.bf16.msra.mxu0 %v422
  %1118 = vmatprep.subr.bf16.mxu0 %v427
  %1119 = vmatpush1.bf16.msra.mxu0 %v426
  %1120 = vmatprep.subr.bf16.mxu0 %v431
  %1121 = vmatpush1.bf16.msra.mxu0 %v430
  %1122 = vmatprep.subr.bf16.mxu0 %v435
  %1123 = vmatpush1.bf16.msra.mxu0 %v434
  %1124 = vmatprep.subr.bf16.mxu0 %v439
  %1125 = vmatpush1.bf16.msra.mxu0 %v438
  %1126 = vmatprep.subr.bf16.mxu0 0
  %1127 = vmatpush1.bf16.msra.mxu0 0
  %1128 = vmatprep.subr.bf16.mxu0 0
  %1129 = vmatpush1.bf16.msra.mxu0 0
  %1130 = vmatprep.subr.bf16.mxu0 0
  %1131 = vmatpush1.bf16.msra.mxu0 0
  %1132 = vmatprep.subr.bf16.mxu0 0
  %1133 = vmatpush1.bf16.msra.mxu0 0
  %1134 = vmatprep.subr.bf16.mxu0 0
  %1135 = vmatpush1.bf16.msra.mxu0 0
  %1136 = vmatprep.subr.bf16.mxu0 0
  %1137 = vmatpush1.bf16.msra.mxu0 0
  %1138 = vmatprep.subr.bf16.mxu0 0
  %1139 = vmatpush1.bf16.msra.mxu0 0
  %1140 = vmatprep.subr.bf16.mxu0 0
  %1141 = vmatpush1.bf16.msra.mxu0 0
  %1142 = vmatprep.mubr.bf16.mxu0 0
  %1143 = vmatmul.mubr.bf16.gmra.mrb[0].mxu0 %v1104
  %v1144 = vpop.f32.mrb[0].mxu0
  %v1145 = vadd.f32 %v1106, %v1144
  %v1146 = vpop.f32.mrb[0].mxu0
  %v1147 = vadd.f32 %v1107, %v1146
  %v1148 = vpop.f32.mrb[0].mxu0
  %v1149 = vpop.f32.mrb[0].mxu0
  %1150 = vdwg.mxu0
  %1151 = vmatprep.subr.bf16.mxu0 %v413
  %1152 = vmatpush1.bf16.msra.mxu0 %v412
  %1153 = vmatprep.subr.bf16.mxu0 %v417
  %1154 = vmatpush1.bf16.msra.mxu0 %v416
  %1155 = vmatprep.subr.bf16.mxu0 %v421
  %1156 = vmatpush1.bf16.msra.mxu0 %v420
  %1157 = vmatprep.subr.bf16.mxu0 %v425
  %1158 = vmatpush1.bf16.msra.mxu0 %v424
  %1159 = vmatprep.subr.bf16.mxu0 %v429
  %1160 = vmatpush1.bf16.msra.mxu0 %v428
  %1161 = vmatprep.subr.bf16.mxu0 %v433
  %1162 = vmatpush1.bf16.msra.mxu0 %v432
  %1163 = vmatprep.subr.bf16.mxu0 %v437
  %1164 = vmatpush1.bf16.msra.mxu0 %v436
  %1165 = vmatprep.subr.bf16.mxu0 %v441
  %1166 = vmatpush1.bf16.msra.mxu0 %v440
  %1167 = vmatprep.subr.bf16.mxu0 0
  %1168 = vmatpush1.bf16.msra.mxu0 0
  %1169 = vmatprep.subr.bf16.mxu0 0
  %1170 = vmatpush1.bf16.msra.mxu0 0
  %1171 = vmatprep.subr.bf16.mxu0 0
  %1172 = vmatpush1.bf16.msra.mxu0 0
  %1173 = vmatprep.subr.bf16.mxu0 0
  %1174 = vmatpush1.bf16.msra.mxu0 0
  %1175 = vmatprep.subr.bf16.mxu0 0
  %1176 = vmatpush1.bf16.msra.mxu0 0
  %1177 = vmatprep.subr.bf16.mxu0 0
  %1178 = vmatpush1.bf16.msra.mxu0 0
  %1179 = vmatprep.subr.bf16.mxu0 0
  %1180 = vmatpush1.bf16.msra.mxu0 0
  %1181 = vmatprep.subr.bf16.mxu0 0
  %1182 = vmatpush1.bf16.msra.mxu0 0
  %1183 = vmatprep.mubr.bf16.mxu0 0
  %1184 = vmatmul.mubr.bf16.gmra.mrb[0].mxu0 %v1104
  %v1185 = vpop.f32.mrb[0].mxu0
  %v1186 = vadd.f32 %v1108, %v1185
  %v1187 = vpop.f32.mrb[0].mxu0
  %v1188 = vadd.f32 %v1109, %v1187
  %v1189 = vpop.f32.mrb[0].mxu0
  %v1190 = vpop.f32.mrb[0].mxu0
  %1191 = vdwg.mxu0
  %v1192 = vmul.f32 %v1145, 0.5
  %v1193 = vtanh.pop %v1192
  %v1194 = vmul.f32 %v1193, 0.5
  %v1195 = vadd.f32 %v1194, 0.5
  %v1196 = vmul.f32 %v1147, 0.5
  %v1197 = vtanh.pop %v1196
  %v1198 = vmul.f32 %v1197, 0.5
  %v1199 = vadd.f32 %v1198, 0.5
  %v1200 = vtanh.pop %v1186
  %v1201 = vmul.f32 %v1188, 0.5
  %v1202 = vtanh.pop %v1201
  %v1203 = vmul.f32 %v1202, 0.5
  %v1204 = vadd.f32 %v1203, 0.5
  %v1205 = vmul.f32 %v1199, %v1101
  %v1206 = vmul.f32 %v1195, %v1200
  %v1207 = vadd.f32 %v1205, %v1206
  %v1208 = vtanh.pop %v1207
  %v1209 = vmul.f32 %v1204, %v1208
  %v1210 = vpack.c.bf16 %v1209, %v1209
  %s1211 = scalar_lea.vmem [#allocation2], 224
  %v1212 = vld [vmem:[%s1211] sm:$0xff]
  %v1213 = vld [vmem:[%s1211 + $0x8] sm:$0xff]
  %v1214 = vld [vmem:[%s1211 + $0x10] sm:$0xff]
  %v1215 = vld [vmem:[%s1211 + $0x18] sm:$0xff]
  %1216 = vmatprep.subr.bf16.mxu0 %v411
  %1217 = vmatpush1.bf16.msra.mxu0 %v410
  %1218 = vmatprep.subr.bf16.mxu0 %v415
  %1219 = vmatpush1.bf16.msra.mxu0 %v414
  %1220 = vmatprep.subr.bf16.mxu0 %v419
  %1221 = vmatpush1.bf16.msra.mxu0 %v418
  %1222 = vmatprep.subr.bf16.mxu0 %v423
  %1223 = vmatpush1.bf16.msra.mxu0 %v422
  %1224 = vmatprep.subr.bf16.mxu0 %v427
  %1225 = vmatpush1.bf16.msra.mxu0 %v426
  %1226 = vmatprep.subr.bf16.mxu0 %v431
  %1227 = vmatpush1.bf16.msra.mxu0 %v430
  %1228 = vmatprep.subr.bf16.mxu0 %v435
  %1229 = vmatpush1.bf16.msra.mxu0 %v434
  %1230 = vmatprep.subr.bf16.mxu0 %v439
  %1231 = vmatpush1.bf16.msra.mxu0 %v438
  %1232 = vmatprep.subr.bf16.mxu0 0
  %1233 = vmatpush1.bf16.msra.mxu0 0
  %1234 = vmatprep.subr.bf16.mxu0 0
  %1235 = vmatpush1.bf16.msra.mxu0 0
  %1236 = vmatprep.subr.bf16.mxu0 0
  %1237 = vmatpush1.bf16.msra.mxu0 0
  %1238 = vmatprep.subr.bf16.mxu0 0
  %1239 = vmatpush1.bf16.msra.mxu0 0
  %1240 = vmatprep.subr.bf16.mxu0 0
  %1241 = vmatpush1.bf16.msra.mxu0 0
  %1242 = vmatprep.subr.bf16.mxu0 0
  %1243 = vmatpush1.bf16.msra.mxu0 0
  %1244 = vmatprep.subr.bf16.mxu0 0
  %1245 = vmatpush1.bf16.msra.mxu0 0
  %1246 = vmatprep.subr.bf16.mxu0 0
  %1247 = vmatpush1.bf16.msra.mxu0 0
  %1248 = vmatprep.mubr.bf16.mxu0 0
  %1249 = vmatmul.mubr.bf16.gmra.mrb[0].mxu0 %v1210
  %v1250 = vpop.f32.mrb[0].mxu0
  %v1251 = vadd.f32 %v1212, %v1250
  %v1252 = vpop.f32.mrb[0].mxu0
  %v1253 = vadd.f32 %v1213, %v1252
  %v1254 = vpop.f32.mrb[0].mxu0
  %v1255 = vpop.f32.mrb[0].mxu0
  %1256 = vdwg.mxu0
  %1257 = vmatprep.subr.bf16.mxu0 %v413
  %1258 = vmatpush1.bf16.msra.mxu0 %v412
  %1259 = vmatprep.subr.bf16.mxu0 %v417
  %1260 = vmatpush1.bf16.msra.mxu0 %v416
  %1261 = vmatprep.subr.bf16.mxu0 %v421
  %1262 = vmatpush1.bf16.msra.mxu0 %v420
  %1263 = vmatprep.subr.bf16.mxu0 %v425
  %1264 = vmatpush1.bf16.msra.mxu0 %v424
  %1265 = vmatprep.subr.bf16.mxu0 %v429
  %1266 = vmatpush1.bf16.msra.mxu0 %v428
  %1267 = vmatprep.subr.bf16.mxu0 %v433
  %1268 = vmatpush1.bf16.msra.mxu0 %v432
  %1269 = vmatprep.subr.bf16.mxu0 %v437
  %1270 = vmatpush1.bf16.msra.mxu0 %v436
  %1271 = vmatprep.subr.bf16.mxu0 %v441
  %1272 = vmatpush1.bf16.msra.mxu0 %v440
  %1273 = vmatprep.subr.bf16.mxu0 0
  %1274 = vmatpush1.bf16.msra.mxu0 0
  %1275 = vmatprep.subr.bf16.mxu0 0
  %1276 = vmatpush1.bf16.msra.mxu0 0
  %1277 = vmatprep.subr.bf16.mxu0 0
  %1278 = vmatpush1.bf16.msra.mxu0 0
  %1279 = vmatprep.subr.bf16.mxu0 0
  %1280 = vmatpush1.bf16.msra.mxu0 0
  %1281 = vmatprep.subr.bf16.mxu0 0
  %1282 = vmatpush1.bf16.msra.mxu0 0
  %1283 = vmatprep.subr.bf16.mxu0 0
  %1284 = vmatpush1.bf16.msra.mxu0 0
  %1285 = vmatprep.subr.bf16.mxu0 0
  %1286 = vmatpush1.bf16.msra.mxu0 0
  %1287 = vmatprep.subr.bf16.mxu0 0
  %1288 = vmatpush1.bf16.msra.mxu0 0
  %1289 = vmatprep.mubr.bf16.mxu0 0
  %1290 = vmatmul.mubr.bf16.gmra.mrb[0].mxu0 %v1210
  %v1291 = vpop.f32.mrb[0].mxu0
  %v1292 = vadd.f32 %v1214, %v1291
  %v1293 = vpop.f32.mrb[0].mxu0
  %v1294 = vadd.f32 %v1215, %v1293
  %v1295 = vpop.f32.mrb[0].mxu0
  %v1296 = vpop.f32.mrb[0].mxu0
  %1297 = vdwg.mxu0
  %v1298 = vmul.f32 %v1251, 0.5
  %v1299 = vtanh.pop %v1298
  %v1300 = vmul.f32 %v1299, 0.5
  %v1301 = vadd.f32 %v1300, 0.5
  %v1302 = vmul.f32 %v1253, 0.5
  %v1303 = vtanh.pop %v1302
  %v1304 = vmul.f32 %v1303, 0.5
  %v1305 = vadd.f32 %v1304, 0.5
  %v1306 = vtanh.pop %v1292
  %v1307 = vmul.f32 %v1294, 0.5
  %v1308 = vtanh.pop %v1307
  %v1309 = vmul.f32 %v1308, 0.5
  %v1310 = vadd.f32 %v1309, 0.5
  %v1311 = vmul.f32 %v1305, %v1207
  %v1312 = vmul.f32 %v1301, %v1306
  %v1313 = vadd.f32 %v1311, %v1312
  %v1314 = vtanh.pop %v1313
  %v1315 = vmul.f32 %v1310, %v1314
  %1316 = vst [vmem:[#allocation3] sm:$0xff] %v1315
  %1317 = vst [vmem:[#allocation4] sm:$0xff] %v1313
  // Predicated region
  $region18: #{mylstm_forward.1} parent=0 // pred_check
    %p1318 = pneg %p17
  $region19: #{mylstm_forward.1} parent=0 // pred_check_branch
    %1320 = sbr.rel (%p1318) target = $region21
  $region20: #{mylstm_forward.1} parent=0 // pred_region
    %v1321 = vld [vmem:[#allocation3] sm:$0xff]
    %1322 = vst [vmem:[%s3] sm:$0xff] %v1321
    %v1323 = vld [vmem:[#allocation4] sm:$0xff]
    %1324 = vst [vmem:[%s4] sm:$0xff] %v1323
  $region21: #{mylstm_forward.1} parent=0 // pred_fallthru
    _
  // Predicated region
  $region22: #{mylstm_forward.1} parent=0 // pred_check
    _
  $region23: #{mylstm_forward.1} parent=0 // pred_check_branch
    %1326 = sbr.rel (0) target = $region25
  $region24: #{mylstm_forward.1} parent=0 // pred_region
    _
  $region25: #{mylstm_forward.1} parent=0 // pred_fallthru
    _
  // Predicated region
  $region26: #{mylstm_forward.1} parent=0 // pred_check
    _
  $region27: #{mylstm_forward.1} parent=0 // pred_check_branch
    %1328 = sbr.rel (0) target = $region29
  $region28: #{mylstm_forward.1} parent=0 // pred_region
    _
  $region29: #{mylstm_forward.1} parent=0 // pred_fallthru
    _
  // Predicated region
  $region30: #{mylstm_forward.1} parent=0 // pred_check
    _
  $region31: #{mylstm_forward.1} parent=0 // pred_check_branch
    %1330 = sbr.rel (0) target = $region33
  $region32: #{mylstm_forward.1} parent=0 // pred_region
    _
  $region33: #{mylstm_forward.1} parent=0 // pred_fallthru
    _
  // Predicated region
  $region34: #{mylstm_forward.1} parent=0 // pred_check
    _
  $region35: #{mylstm_forward.1} parent=0 // pred_check_branch
    %1332 = sbr.rel (0) target = $region37
  $region36: #{mylstm_forward.1} parent=0 // pred_region
    _
  $region37: #{mylstm_forward.1} parent=0 // pred_fallthru
    _

</llo_original>
